<compile_context>
chip_gen: v6e
topology: v6e:2x2x1
jax: 0.10.0
libtpu: 0.0.40
codegen_flags: <defaults>
</compile_context>

<pallas_src>
import functools

import jax
import jax.numpy as jnp
from jax.experimental import pallas as pl
from jax.experimental.pallas import tpu as pltpu

KSIZE = 7
PAD = 3


def _spatial_attention_kernel(x_ref, wk_ref, rowm_ref, colm_ref, o_ref, *, H, W):
    # x_ref:    (NB, C, H*W)   input block (lane axis = H*W)
    # wk_ref:   (2*7*7,)       flattened conv weight in SMEM (scalar taps)
    # rowm_ref: (7, H*W)       0/1 row-validity mask per kernel row (zero padding)
    # colm_ref: (7, H*W)       0/1 col-validity mask per kernel col (zero padding)
    # o_ref:    (NB, 1, H*W)   spatial attention map
    HW = H * W

    x = x_ref[...].astype(jnp.float32)                 # (NB, C, HW)

    # Cross-channel pooling -> lane-dense (NB, HW) maps.
    avg_c = jnp.mean(x, axis=1)                        # conv input channel 0
    max_c = jnp.max(x, axis=1)                         # conv input channel 1

    def shifted(v, shift):
        # rolled[p] = v[p + s]  with  shift = (-s) mod HW ; XLU lane roll.
        return v if shift == 0 else pltpu.roll(v, shift, axis=1)

    # Hoist the column masks (loaded once, reused for every kernel row).
    cmasks = [colm_ref[pl.ds(kw, 1), :] for kw in range(KSIZE)]   # each (1, HW)

    # 7x7 zero-padded conv over the 2-channel pooled map, 1 output channel.
    # One independent accumulator per kernel row keeps the VALU dependency chain short.
    row_accs = []
    for kh in range(KSIZE):
        dh = kh - PAD
        sh_r = (-dh * W) % HW
        ra = shifted(avg_c, sh_r)                      # row-shifted avg map
        rm = shifted(max_c, sh_r)                      # row-shifted max map
        if dh != 0:
            rmask = rowm_ref[pl.ds(kh, 1), :]          # (1, HW)
            ra = ra * rmask
            rm = rm * rmask
        acc = None
        for kw in range(KSIZE):
            dw = kw - PAD
            sh_c = (-dw) % HW
            w_a = wk_ref[kh * KSIZE + kw]                      # avg-channel weight
            w_m = wk_ref[KSIZE * KSIZE + kh * KSIZE + kw]      # max-channel weight
            tap = w_a * shifted(ra, sh_c) + w_m * shifted(rm, sh_c)
            if dw != 0:
                tap = tap * cmasks[kw]
            acc = tap if acc is None else acc + tap
        row_accs.append(acc)

    conv = row_accs[0]
    for a in row_accs[1:]:
        conv = conv + a

    sa = jax.nn.sigmoid(conv)                          # (NB, HW)
    o_ref[...] = sa[:, None, :].astype(o_ref.dtype)


def spatial_attention_pallas(x, w, *, block_n=None):
    """x: (N, C, H, W), w: (1, 2, 7, 7) conv weight (no bias). Returns (N, 1, H, W)."""
    N, C, H, W = x.shape
    HW = H * W
    assert w.shape == (1, 2, KSIZE, KSIZE)

    if block_n is None:
        # Pack samples per grid step for bigger DMA blocks, but keep >= 2 grid
        # steps when possible so both v7x TensorCores get work.
        cap = max(1, min(8, N // 2))
        block_n = max(b for b in range(1, cap + 1) if N % b == 0)

    xf = x.reshape(N, C, HW)                           # lane-dense spatial axis
    wf = w.reshape(-1).astype(jnp.float32)             # (98,) scalar taps -> SMEM

    # Static 0/1 masks implementing the zero padding of the 7x7 "same" conv when
    # taps are expressed as rolls of the flattened (H*W) maps.
    r_idx = jnp.arange(HW, dtype=jnp.int32) // W       # row of each flat position
    c_idx = jnp.arange(HW, dtype=jnp.int32) % W        # col of each flat position
    offs = jnp.arange(KSIZE, dtype=jnp.int32) - PAD    # (-3..3)
    row_masks = ((r_idx[None, :] + offs[:, None] >= 0)
                 & (r_idx[None, :] + offs[:, None] < H)).astype(jnp.float32)   # (7, HW)
    col_masks = ((c_idx[None, :] + offs[:, None] >= 0)
                 & (c_idx[None, :] + offs[:, None] < W)).astype(jnp.float32)   # (7, HW)

    kernel = functools.partial(_spatial_attention_kernel, H=H, W=W)

    out = pl.pallas_call(
        kernel,
        out_shape=jax.ShapeDtypeStruct((N, 1, HW), x.dtype),
        grid_spec=pltpu.PrefetchScalarGridSpec(
            num_scalar_prefetch=0,
            grid=(N // block_n,),
            in_specs=[
                pl.BlockSpec((block_n, C, HW), lambda n: (n, 0, 0)),
                pl.BlockSpec(memory_space=pltpu.MemorySpace.SMEM),   # conv weights
                pl.BlockSpec((KSIZE, HW), lambda n: (0, 0)),         # row masks
                pl.BlockSpec((KSIZE, HW), lambda n: (0, 0)),         # col masks
            ],
            out_specs=pl.BlockSpec((block_n, 1, HW), lambda n: (n, 0, 0)),
        ),
        compiler_params=pltpu.CompilerParams(
            dimension_semantics=("parallel",),
            vmem_limit_bytes=32 * 1024 * 1024,
        ),
    )(xf, wf, row_masks, col_masks)

    return out.reshape(N, 1, H, W)


def spatial_attention_ref(x, w):
    """Pure-JAX reference matching the PyTorch SpatialAttention forward."""
    avg = jnp.mean(x, axis=1, keepdims=True)
    mx = jnp.max(x, axis=1, keepdims=True)
    s = jnp.concatenate([avg, mx], axis=1)             # (N, 2, H, W)
    conv = jax.lax.conv_general_dilated(
        s, w, (1, 1), [(PAD, PAD), (PAD, PAD)],
        dimension_numbers=("NCHW", "OIHW", "NCHW"))
    return jax.nn.sigmoid(conv)                        # (N, 1, H, W)


if __name__ == "__main__":
    N, C, H, W = 2, 4, 16, 16

    key = jax.random.PRNGKey(0)
    kx, kw = jax.random.split(key)
    x = jax.random.normal(kx, (N, C, H, W), dtype=jnp.float32)
    w = 0.1 * jax.random.normal(kw, (1, 2, KSIZE, KSIZE), dtype=jnp.float32)

    out = spatial_attention_pallas(x, w)
    out = jax.block_until_ready(out)

    ref = spatial_attention_ref(x, w)
    assert out.shape == (N, 1, H, W)
    err = float(jnp.max(jnp.abs(out - ref)))
    assert jnp.allclose(out, ref, atol=1e-5, rtol=1e-5), err

    print("KERNEL_OK")
</pallas_src>

<mosaic_0001>
module attributes {stable_mosaic.version = 11 : i64} {
  func.func @_spatial_attention_kernel(%arg0: i32, %arg1: memref<1x4x256xf32, #tpu.memory_space<vmem>>, %arg2: memref<98xf32, #tpu.memory_space<smem>>, %arg3: memref<7x256xf32, #tpu.memory_space<vmem>>, %arg4: memref<7x256xf32, #tpu.memory_space<vmem>>, %arg5: memref<1x1x256xf32, #tpu.memory_space<vmem>>) attributes {dimension_semantics = [#tpu.dimension_semantics<parallel>], iteration_bounds = array<i64: 2>, scalar_prefetch = 0 : i64, scratch_operands = 0 : i64, tpu.core_type = #tpu.core_type<tc>, window_params = [{transform_indices = @transform_0, window_bounds = array<i64: 1, 4, 256>}, {transform_indices = @transform_1, window_bounds = array<i64: 98>}, {pipeline_mode = #tpu.pipeline_mode<synchronous>, transform_indices = @transform_2, window_bounds = array<i64: 7, 256>}, {pipeline_mode = #tpu.pipeline_mode<synchronous>, transform_indices = @transform_3, window_bounds = array<i64: 7, 256>}, {transform_indices = @transform_4, window_bounds = array<i64: 1, 1, 256>}]} {
    %c0 = arith.constant 0 : index
    %c0_0 = arith.constant 0 : index
    %c0_1 = arith.constant 0 : index
    %0 = vector.load %arg1[%c0, %c0_0, %c0_1] : memref<1x4x256xf32, #tpu.memory_space<vmem>>, vector<1x4x256xf32>
    %cst = arith.constant dense<0.000000e+00> : vector<1x256xf32>
    %1 = vector.multi_reduction <add>, %0, %cst [1] : vector<1x4x256xf32> to vector<1x256xf32>
    %cst_2 = arith.constant 4.000000e+00 : f32
    %2 = vector.broadcast %cst_2 : f32 to vector<1x256xf32>
    %3 = arith.divf %1, %2 : vector<1x256xf32>
    %cst_3 = arith.constant dense<0xFF800000> : vector<1x256xf32>
    %4 = vector.multi_reduction <maximumf>, %0, %cst_3 [1] : vector<1x4x256xf32> to vector<1x256xf32>
    %c0_4 = arith.constant 0 : index
    %c0_5 = arith.constant 0 : index
    %5 = vector.load %arg4[%c0_4, %c0_5] : memref<7x256xf32, #tpu.memory_space<vmem>>, vector<1x256xf32>
    %c1 = arith.constant 1 : index
    %c0_6 = arith.constant 0 : index
    %6 = vector.load %arg4[%c1, %c0_6] : memref<7x256xf32, #tpu.memory_space<vmem>>, vector<1x256xf32>
    %c2 = arith.constant 2 : index
    %c0_7 = arith.constant 0 : index
    %7 = vector.load %arg4[%c2, %c0_7] : memref<7x256xf32, #tpu.memory_space<vmem>>, vector<1x256xf32>
    %c4 = arith.constant 4 : index
    %c0_8 = arith.constant 0 : index
    %8 = vector.load %arg4[%c4, %c0_8] : memref<7x256xf32, #tpu.memory_space<vmem>>, vector<1x256xf32>
    %c5 = arith.constant 5 : index
    %c0_9 = arith.constant 0 : index
    %9 = vector.load %arg4[%c5, %c0_9] : memref<7x256xf32, #tpu.memory_space<vmem>>, vector<1x256xf32>
    %c6 = arith.constant 6 : index
    %c0_10 = arith.constant 0 : index
    %10 = vector.load %arg4[%c6, %c0_10] : memref<7x256xf32, #tpu.memory_space<vmem>>, vector<1x256xf32>
    %c48_i32 = arith.constant 48 : i32
    %11 = tpu.dynamic_rotate %3 by %c48_i32 dim 1 : vector<1x256xf32>, i32 -> vector<1x256xf32>
    %c48_i32_11 = arith.constant 48 : i32
    %12 = tpu.dynamic_rotate %4 by %c48_i32_11 dim 1 : vector<1x256xf32>, i32 -> vector<1x256xf32>
    %c0_12 = arith.constant 0 : index
    %c0_13 = arith.constant 0 : index
    %13 = vector.load %arg3[%c0_12, %c0_13] : memref<7x256xf32, #tpu.memory_space<vmem>>, vector<1x256xf32>
    %14 = arith.mulf %11, %13 : vector<1x256xf32>
    %15 = arith.mulf %12, %13 : vector<1x256xf32>
    %c0_14 = arith.constant 0 : index
    %16 = memref.load %arg2[%c0_14] : memref<98xf32, #tpu.memory_space<smem>>
    %c49 = arith.constant 49 : index
    %17 = memref.load %arg2[%c49] : memref<98xf32, #tpu.memory_space<smem>>
    %c3_i32 = arith.constant 3 : i32
    %18 = tpu.dynamic_rotate %14 by %c3_i32 dim 1 : vector<1x256xf32>, i32 -> vector<1x256xf32>
    %19 = vector.broadcast %16 : f32 to vector<1x256xf32>
    %20 = arith.mulf %19, %18 : vector<1x256xf32>
    %c3_i32_15 = arith.constant 3 : i32
    %21 = tpu.dynamic_rotate %15 by %c3_i32_15 dim 1 : vector<1x256xf32>, i32 -> vector<1x256xf32>
    %22 = vector.broadcast %17 : f32 to vector<1x256xf32>
    %23 = arith.mulf %22, %21 : vector<1x256xf32>
    %24 = arith.addf %20, %23 : vector<1x256xf32>
    %25 = arith.mulf %24, %5 : vector<1x256xf32>
    %c1_16 = arith.constant 1 : index
    %26 = memref.load %arg2[%c1_16] : memref<98xf32, #tpu.memory_space<smem>>
    %c50 = arith.constant 50 : index
    %27 = memref.load %arg2[%c50] : memref<98xf32, #tpu.memory_space<smem>>
    %c2_i32 = arith.constant 2 : i32
    %28 = tpu.dynamic_rotate %14 by %c2_i32 dim 1 : vector<1x256xf32>, i32 -> vector<1x256xf32>
    %29 = vector.broadcast %26 : f32 to vector<1x256xf32>
    %30 = arith.mulf %29, %28 : vector<1x256xf32>
    %c2_i32_17 = arith.constant 2 : i32
    %31 = tpu.dynamic_rotate %15 by %c2_i32_17 dim 1 : vector<1x256xf32>, i32 -> vector<1x256xf32>
    %32 = vector.broadcast %27 : f32 to vector<1x256xf32>
    %33 = arith.mulf %32, %31 : vector<1x256xf32>
    %34 = arith.addf %30, %33 : vector<1x256xf32>
    %35 = arith.mulf %34, %6 : vector<1x256xf32>
    %36 = arith.addf %25, %35 : vector<1x256xf32>
    %c2_18 = arith.constant 2 : index
    %37 = memref.load %arg2[%c2_18] : memref<98xf32, #tpu.memory_space<smem>>
    %c51 = arith.constant 51 : index
    %38 = memref.load %arg2[%c51] : memref<98xf32, #tpu.memory_space<smem>>
    %c1_i32 = arith.constant 1 : i32
    %39 = tpu.dynamic_rotate %14 by %c1_i32 dim 1 : vector<1x256xf32>, i32 -> vector<1x256xf32>
    %40 = vector.broadcast %37 : f32 to vector<1x256xf32>
    %41 = arith.mulf %40, %39 : vector<1x256xf32>
    %c1_i32_19 = arith.constant 1 : i32
    %42 = tpu.dynamic_rotate %15 by %c1_i32_19 dim 1 : vector<1x256xf32>, i32 -> vector<1x256xf32>
    %43 = vector.broadcast %38 : f32 to vector<1x256xf32>
    %44 = arith.mulf %43, %42 : vector<1x256xf32>
    %45 = arith.addf %41, %44 : vector<1x256xf32>
    %46 = arith.mulf %45, %7 : vector<1x256xf32>
    %47 = arith.addf %36, %46 : vector<1x256xf32>
    %c3 = arith.constant 3 : index
    %48 = memref.load %arg2[%c3] : memref<98xf32, #tpu.memory_space<smem>>
    %c52 = arith.constant 52 : index
    %49 = memref.load %arg2[%c52] : memref<98xf32, #tpu.memory_space<smem>>
    %50 = vector.broadcast %48 : f32 to vector<1x256xf32>
    %51 = arith.mulf %50, %14 : vector<1x256xf32>
    %52 = vector.broadcast %49 : f32 to vector<1x256xf32>
    %53 = arith.mulf %52, %15 : vector<1x256xf32>
    %54 = arith.addf %51, %53 : vector<1x256xf32>
    %55 = arith.addf %47, %54 : vector<1x256xf32>
    %c4_20 = arith.constant 4 : index
    %56 = memref.load %arg2[%c4_20] : memref<98xf32, #tpu.memory_space<smem>>
    %c53 = arith.constant 53 : index
    %57 = memref.load %arg2[%c53] : memref<98xf32, #tpu.memory_space<smem>>
    %c255_i32 = arith.constant 255 : i32
    %58 = tpu.dynamic_rotate %14 by %c255_i32 dim 1 : vector<1x256xf32>, i32 -> vector<1x256xf32>
    %59 = vector.broadcast %56 : f32 to vector<1x256xf32>
    %60 = arith.mulf %59, %58 : vector<1x256xf32>
    %c255_i32_21 = arith.constant 255 : i32
    %61 = tpu.dynamic_rotate %15 by %c255_i32_21 dim 1 : vector<1x256xf32>, i32 -> vector<1x256xf32>
    %62 = vector.broadcast %57 : f32 to vector<1x256xf32>
    %63 = arith.mulf %62, %61 : vector<1x256xf32>
    %64 = arith.addf %60, %63 : vector<1x256xf32>
    %65 = arith.mulf %64, %8 : vector<1x256xf32>
    %66 = arith.addf %55, %65 : vector<1x256xf32>
    %c5_22 = arith.constant 5 : index
    %67 = memref.load %arg2[%c5_22] : memref<98xf32, #tpu.memory_space<smem>>
    %c54 = arith.constant 54 : index
    %68 = memref.load %arg2[%c54] : memref<98xf32, #tpu.memory_space<smem>>
    %c254_i32 = arith.constant 254 : i32
    %69 = tpu.dynamic_rotate %14 by %c254_i32 dim 1 : vector<1x256xf32>, i32 -> vector<1x256xf32>
    %70 = vector.broadcast %67 : f32 to vector<1x256xf32>
    %71 = arith.mulf %70, %69 : vector<1x256xf32>
    %c254_i32_23 = arith.constant 254 : i32
    %72 = tpu.dynamic_rotate %15 by %c254_i32_23 dim 1 : vector<1x256xf32>, i32 -> vector<1x256xf32>
    %73 = vector.broadcast %68 : f32 to vector<1x256xf32>
    %74 = arith.mulf %73, %72 : vector<1x256xf32>
    %75 = arith.addf %71, %74 : vector<1x256xf32>
    %76 = arith.mulf %75, %9 : vector<1x256xf32>
    %77 = arith.addf %66, %76 : vector<1x256xf32>
    %c6_24 = arith.constant 6 : index
    %78 = memref.load %arg2[%c6_24] : memref<98xf32, #tpu.memory_space<smem>>
    %c55 = arith.constant 55 : index
    %79 = memref.load %arg2[%c55] : memref<98xf32, #tpu.memory_space<smem>>
    %c253_i32 = arith.constant 253 : i32
    %80 = tpu.dynamic_rotate %14 by %c253_i32 dim 1 : vector<1x256xf32>, i32 -> vector<1x256xf32>
    %81 = vector.broadcast %78 : f32 to vector<1x256xf32>
    %82 = arith.mulf %81, %80 : vector<1x256xf32>
    %c253_i32_25 = arith.constant 253 : i32
    %83 = tpu.dynamic_rotate %15 by %c253_i32_25 dim 1 : vector<1x256xf32>, i32 -> vector<1x256xf32>
    %84 = vector.broadcast %79 : f32 to vector<1x256xf32>
    %85 = arith.mulf %84, %83 : vector<1x256xf32>
    %86 = arith.addf %82, %85 : vector<1x256xf32>
    %87 = arith.mulf %86, %10 : vector<1x256xf32>
    %88 = arith.addf %77, %87 : vector<1x256xf32>
    %c32_i32 = arith.constant 32 : i32
    %89 = tpu.dynamic_rotate %3 by %c32_i32 dim 1 : vector<1x256xf32>, i32 -> vector<1x256xf32>
    %c32_i32_26 = arith.constant 32 : i32
    %90 = tpu.dynamic_rotate %4 by %c32_i32_26 dim 1 : vector<1x256xf32>, i32 -> vector<1x256xf32>
    %c1_27 = arith.constant 1 : index
    %c0_28 = arith.constant 0 : index
    %91 = vector.load %arg3[%c1_27, %c0_28] : memref<7x256xf32, #tpu.memory_space<vmem>>, vector<1x256xf32>
    %92 = arith.mulf %89, %91 : vector<1x256xf32>
    %93 = arith.mulf %90, %91 : vector<1x256xf32>
    %c7 = arith.constant 7 : index
    %94 = memref.load %arg2[%c7] : memref<98xf32, #tpu.memory_space<smem>>
    %c56 = arith.constant 56 : index
    %95 = memref.load %arg2[%c56] : memref<98xf32, #tpu.memory_space<smem>>
    %c3_i32_29 = arith.constant 3 : i32
    %96 = tpu.dynamic_rotate %92 by %c3_i32_29 dim 1 : vector<1x256xf32>, i32 -> vector<1x256xf32>
    %97 = vector.broadcast %94 : f32 to vector<1x256xf32>
    %98 = arith.mulf %97, %96 : vector<1x256xf32>
    %c3_i32_30 = arith.constant 3 : i32
    %99 = tpu.dynamic_rotate %93 by %c3_i32_30 dim 1 : vector<1x256xf32>, i32 -> vector<1x256xf32>
    %100 = vector.broadcast %95 : f32 to vector<1x256xf32>
    %101 = arith.mulf %100, %99 : vector<1x256xf32>
    %102 = arith.addf %98, %101 : vector<1x256xf32>
    %103 = arith.mulf %102, %5 : vector<1x256xf32>
    %c8 = arith.constant 8 : index
    %104 = memref.load %arg2[%c8] : memref<98xf32, #tpu.memory_space<smem>>
    %c57 = arith.constant 57 : index
    %105 = memref.load %arg2[%c57] : memref<98xf32, #tpu.memory_space<smem>>
    %c2_i32_31 = arith.constant 2 : i32
    %106 = tpu.dynamic_rotate %92 by %c2_i32_31 dim 1 : vector<1x256xf32>, i32 -> vector<1x256xf32>
    %107 = vector.broadcast %104 : f32 to vector<1x256xf32>
    %108 = arith.mulf %107, %106 : vector<1x256xf32>
    %c2_i32_32 = arith.constant 2 : i32
    %109 = tpu.dynamic_rotate %93 by %c2_i32_32 dim 1 : vector<1x256xf32>, i32 -> vector<1x256xf32>
    %110 = vector.broadcast %105 : f32 to vector<1x256xf32>
    %111 = arith.mulf %110, %109 : vector<1x256xf32>
    %112 = arith.addf %108, %111 : vector<1x256xf32>
    %113 = arith.mulf %112, %6 : vector<1x256xf32>
    %114 = arith.addf %103, %113 : vector<1x256xf32>
    %c9 = arith.constant 9 : index
    %115 = memref.load %arg2[%c9] : memref<98xf32, #tpu.memory_space<smem>>
    %c58 = arith.constant 58 : index
    %116 = memref.load %arg2[%c58] : memref<98xf32, #tpu.memory_space<smem>>
    %c1_i32_33 = arith.constant 1 : i32
    %117 = tpu.dynamic_rotate %92 by %c1_i32_33 dim 1 : vector<1x256xf32>, i32 -> vector<1x256xf32>
    %118 = vector.broadcast %115 : f32 to vector<1x256xf32>
    %119 = arith.mulf %118, %117 : vector<1x256xf32>
    %c1_i32_34 = arith.constant 1 : i32
    %120 = tpu.dynamic_rotate %93 by %c1_i32_34 dim 1 : vector<1x256xf32>, i32 -> vector<1x256xf32>
    %121 = vector.broadcast %116 : f32 to vector<1x256xf32>
    %122 = arith.mulf %121, %120 : vector<1x256xf32>
    %123 = arith.addf %119, %122 : vector<1x256xf32>
    %124 = arith.mulf %123, %7 : vector<1x256xf32>
    %125 = arith.addf %114, %124 : vector<1x256xf32>
    %c10 = arith.constant 10 : index
    %126 = memref.load %arg2[%c10] : memref<98xf32, #tpu.memory_space<smem>>
    %c59 = arith.constant 59 : index
    %127 = memref.load %arg2[%c59] : memref<98xf32, #tpu.memory_space<smem>>
    %128 = vector.broadcast %126 : f32 to vector<1x256xf32>
    %129 = arith.mulf %128, %92 : vector<1x256xf32>
    %130 = vector.broadcast %127 : f32 to vector<1x256xf32>
    %131 = arith.mulf %130, %93 : vector<1x256xf32>
    %132 = arith.addf %129, %131 : vector<1x256xf32>
    %133 = arith.addf %125, %132 : vector<1x256xf32>
    %c11 = arith.constant 11 : index
    %134 = memref.load %arg2[%c11] : memref<98xf32, #tpu.memory_space<smem>>
    %c60 = arith.constant 60 : index
    %135 = memref.load %arg2[%c60] : memref<98xf32, #tpu.memory_space<smem>>
    %c255_i32_35 = arith.constant 255 : i32
    %136 = tpu.dynamic_rotate %92 by %c255_i32_35 dim 1 : vector<1x256xf32>, i32 -> vector<1x256xf32>
    %137 = vector.broadcast %134 : f32 to vector<1x256xf32>
    %138 = arith.mulf %137, %136 : vector<1x256xf32>
    %c255_i32_36 = arith.constant 255 : i32
    %139 = tpu.dynamic_rotate %93 by %c255_i32_36 dim 1 : vector<1x256xf32>, i32 -> vector<1x256xf32>
    %140 = vector.broadcast %135 : f32 to vector<1x256xf32>
    %141 = arith.mulf %140, %139 : vector<1x256xf32>
    %142 = arith.addf %138, %141 : vector<1x256xf32>
    %143 = arith.mulf %142, %8 : vector<1x256xf32>
    %144 = arith.addf %133, %143 : vector<1x256xf32>
    %c12 = arith.constant 12 : index
    %145 = memref.load %arg2[%c12] : memref<98xf32, #tpu.memory_space<smem>>
    %c61 = arith.constant 61 : index
    %146 = memref.load %arg2[%c61] : memref<98xf32, #tpu.memory_space<smem>>
    %c254_i32_37 = arith.constant 254 : i32
    %147 = tpu.dynamic_rotate %92 by %c254_i32_37 dim 1 : vector<1x256xf32>, i32 -> vector<1x256xf32>
    %148 = vector.broadcast %145 : f32 to vector<1x256xf32>
    %149 = arith.mulf %148, %147 : vector<1x256xf32>
    %c254_i32_38 = arith.constant 254 : i32
    %150 = tpu.dynamic_rotate %93 by %c254_i32_38 dim 1 : vector<1x256xf32>, i32 -> vector<1x256xf32>
    %151 = vector.broadcast %146 : f32 to vector<1x256xf32>
    %152 = arith.mulf %151, %150 : vector<1x256xf32>
    %153 = arith.addf %149, %152 : vector<1x256xf32>
    %154 = arith.mulf %153, %9 : vector<1x256xf32>
    %155 = arith.addf %144, %154 : vector<1x256xf32>
    %c13 = arith.constant 13 : index
    %156 = memref.load %arg2[%c13] : memref<98xf32, #tpu.memory_space<smem>>
    %c62 = arith.constant 62 : index
    %157 = memref.load %arg2[%c62] : memref<98xf32, #tpu.memory_space<smem>>
    %c253_i32_39 = arith.constant 253 : i32
    %158 = tpu.dynamic_rotate %92 by %c253_i32_39 dim 1 : vector<1x256xf32>, i32 -> vector<1x256xf32>
    %159 = vector.broadcast %156 : f32 to vector<1x256xf32>
    %160 = arith.mulf %159, %158 : vector<1x256xf32>
    %c253_i32_40 = arith.constant 253 : i32
    %161 = tpu.dynamic_rotate %93 by %c253_i32_40 dim 1 : vector<1x256xf32>, i32 -> vector<1x256xf32>
    %162 = vector.broadcast %157 : f32 to vector<1x256xf32>
    %163 = arith.mulf %162, %161 : vector<1x256xf32>
    %164 = arith.addf %160, %163 : vector<1x256xf32>
    %165 = arith.mulf %164, %10 : vector<1x256xf32>
    %166 = arith.addf %155, %165 : vector<1x256xf32>
    %c16_i32 = arith.constant 16 : i32
    %167 = tpu.dynamic_rotate %3 by %c16_i32 dim 1 : vector<1x256xf32>, i32 -> vector<1x256xf32>
    %c16_i32_41 = arith.constant 16 : i32
    %168 = tpu.dynamic_rotate %4 by %c16_i32_41 dim 1 : vector<1x256xf32>, i32 -> vector<1x256xf32>
    %c2_42 = arith.constant 2 : index
    %c0_43 = arith.constant 0 : index
    %169 = vector.load %arg3[%c2_42, %c0_43] : memref<7x256xf32, #tpu.memory_space<vmem>>, vector<1x256xf32>
    %170 = arith.mulf %167, %169 : vector<1x256xf32>
    %171 = arith.mulf %168, %169 : vector<1x256xf32>
    %c14 = arith.constant 14 : index
    %172 = memref.load %arg2[%c14] : memref<98xf32, #tpu.memory_space<smem>>
    %c63 = arith.constant 63 : index
    %173 = memref.load %arg2[%c63] : memref<98xf32, #tpu.memory_space<smem>>
    %c3_i32_44 = arith.constant 3 : i32
    %174 = tpu.dynamic_rotate %170 by %c3_i32_44 dim 1 : vector<1x256xf32>, i32 -> vector<1x256xf32>
    %175 = vector.broadcast %172 : f32 to vector<1x256xf32>
    %176 = arith.mulf %175, %174 : vector<1x256xf32>
    %c3_i32_45 = arith.constant 3 : i32
    %177 = tpu.dynamic_rotate %171 by %c3_i32_45 dim 1 : vector<1x256xf32>, i32 -> vector<1x256xf32>
    %178 = vector.broadcast %173 : f32 to vector<1x256xf32>
    %179 = arith.mulf %178, %177 : vector<1x256xf32>
    %180 = arith.addf %176, %179 : vector<1x256xf32>
    %181 = arith.mulf %180, %5 : vector<1x256xf32>
    %c15 = arith.constant 15 : index
    %182 = memref.load %arg2[%c15] : memref<98xf32, #tpu.memory_space<smem>>
    %c64 = arith.constant 64 : index
    %183 = memref.load %arg2[%c64] : memref<98xf32, #tpu.memory_space<smem>>
    %c2_i32_46 = arith.constant 2 : i32
    %184 = tpu.dynamic_rotate %170 by %c2_i32_46 dim 1 : vector<1x256xf32>, i32 -> vector<1x256xf32>
    %185 = vector.broadcast %182 : f32 to vector<1x256xf32>
    %186 = arith.mulf %185, %184 : vector<1x256xf32>
    %c2_i32_47 = arith.constant 2 : i32
    %187 = tpu.dynamic_rotate %171 by %c2_i32_47 dim 1 : vector<1x256xf32>, i32 -> vector<1x256xf32>
    %188 = vector.broadcast %183 : f32 to vector<1x256xf32>
    %189 = arith.mulf %188, %187 : vector<1x256xf32>
    %190 = arith.addf %186, %189 : vector<1x256xf32>
    %191 = arith.mulf %190, %6 : vector<1x256xf32>
    %192 = arith.addf %181, %191 : vector<1x256xf32>
    %c16 = arith.constant 16 : index
    %193 = memref.load %arg2[%c16] : memref<98xf32, #tpu.memory_space<smem>>
    %c65 = arith.constant 65 : index
    %194 = memref.load %arg2[%c65] : memref<98xf32, #tpu.memory_space<smem>>
    %c1_i32_48 = arith.constant 1 : i32
    %195 = tpu.dynamic_rotate %170 by %c1_i32_48 dim 1 : vector<1x256xf32>, i32 -> vector<1x256xf32>
    %196 = vector.broadcast %193 : f32 to vector<1x256xf32>
    %197 = arith.mulf %196, %195 : vector<1x256xf32>
    %c1_i32_49 = arith.constant 1 : i32
    %198 = tpu.dynamic_rotate %171 by %c1_i32_49 dim 1 : vector<1x256xf32>, i32 -> vector<1x256xf32>
    %199 = vector.broadcast %194 : f32 to vector<1x256xf32>
    %200 = arith.mulf %199, %198 : vector<1x256xf32>
    %201 = arith.addf %197, %200 : vector<1x256xf32>
    %202 = arith.mulf %201, %7 : vector<1x256xf32>
    %203 = arith.addf %192, %202 : vector<1x256xf32>
    %c17 = arith.constant 17 : index
    %204 = memref.load %arg2[%c17] : memref<98xf32, #tpu.memory_space<smem>>
    %c66 = arith.constant 66 : index
    %205 = memref.load %arg2[%c66] : memref<98xf32, #tpu.memory_space<smem>>
    %206 = vector.broadcast %204 : f32 to vector<1x256xf32>
    %207 = arith.mulf %206, %170 : vector<1x256xf32>
    %208 = vector.broadcast %205 : f32 to vector<1x256xf32>
    %209 = arith.mulf %208, %171 : vector<1x256xf32>
    %210 = arith.addf %207, %209 : vector<1x256xf32>
    %211 = arith.addf %203, %210 : vector<1x256xf32>
    %c18 = arith.constant 18 : index
    %212 = memref.load %arg2[%c18] : memref<98xf32, #tpu.memory_space<smem>>
    %c67 = arith.constant 67 : index
    %213 = memref.load %arg2[%c67] : memref<98xf32, #tpu.memory_space<smem>>
    %c255_i32_50 = arith.constant 255 : i32
    %214 = tpu.dynamic_rotate %170 by %c255_i32_50 dim 1 : vector<1x256xf32>, i32 -> vector<1x256xf32>
    %215 = vector.broadcast %212 : f32 to vector<1x256xf32>
    %216 = arith.mulf %215, %214 : vector<1x256xf32>
    %c255_i32_51 = arith.constant 255 : i32
    %217 = tpu.dynamic_rotate %171 by %c255_i32_51 dim 1 : vector<1x256xf32>, i32 -> vector<1x256xf32>
    %218 = vector.broadcast %213 : f32 to vector<1x256xf32>
    %219 = arith.mulf %218, %217 : vector<1x256xf32>
    %220 = arith.addf %216, %219 : vector<1x256xf32>
    %221 = arith.mulf %220, %8 : vector<1x256xf32>
    %222 = arith.addf %211, %221 : vector<1x256xf32>
    %c19 = arith.constant 19 : index
    %223 = memref.load %arg2[%c19] : memref<98xf32, #tpu.memory_space<smem>>
    %c68 = arith.constant 68 : index
    %224 = memref.load %arg2[%c68] : memref<98xf32, #tpu.memory_space<smem>>
    %c254_i32_52 = arith.constant 254 : i32
    %225 = tpu.dynamic_rotate %170 by %c254_i32_52 dim 1 : vector<1x256xf32>, i32 -> vector<1x256xf32>
    %226 = vector.broadcast %223 : f32 to vector<1x256xf32>
    %227 = arith.mulf %226, %225 : vector<1x256xf32>
    %c254_i32_53 = arith.constant 254 : i32
    %228 = tpu.dynamic_rotate %171 by %c254_i32_53 dim 1 : vector<1x256xf32>, i32 -> vector<1x256xf32>
    %229 = vector.broadcast %224 : f32 to vector<1x256xf32>
    %230 = arith.mulf %229, %228 : vector<1x256xf32>
    %231 = arith.addf %227, %230 : vector<1x256xf32>
    %232 = arith.mulf %231, %9 : vector<1x256xf32>
    %233 = arith.addf %222, %232 : vector<1x256xf32>
    %c20 = arith.constant 20 : index
    %234 = memref.load %arg2[%c20] : memref<98xf32, #tpu.memory_space<smem>>
    %c69 = arith.constant 69 : index
    %235 = memref.load %arg2[%c69] : memref<98xf32, #tpu.memory_space<smem>>
    %c253_i32_54 = arith.constant 253 : i32
    %236 = tpu.dynamic_rotate %170 by %c253_i32_54 dim 1 : vector<1x256xf32>, i32 -> vector<1x256xf32>
    %237 = vector.broadcast %234 : f32 to vector<1x256xf32>
    %238 = arith.mulf %237, %236 : vector<1x256xf32>
    %c253_i32_55 = arith.constant 253 : i32
    %239 = tpu.dynamic_rotate %171 by %c253_i32_55 dim 1 : vector<1x256xf32>, i32 -> vector<1x256xf32>
    %240 = vector.broadcast %235 : f32 to vector<1x256xf32>
    %241 = arith.mulf %240, %239 : vector<1x256xf32>
    %242 = arith.addf %238, %241 : vector<1x256xf32>
    %243 = arith.mulf %242, %10 : vector<1x256xf32>
    %244 = arith.addf %233, %243 : vector<1x256xf32>
    %c21 = arith.constant 21 : index
    %245 = memref.load %arg2[%c21] : memref<98xf32, #tpu.memory_space<smem>>
    %c70 = arith.constant 70 : index
    %246 = memref.load %arg2[%c70] : memref<98xf32, #tpu.memory_space<smem>>
    %c3_i32_56 = arith.constant 3 : i32
    %247 = tpu.dynamic_rotate %3 by %c3_i32_56 dim 1 : vector<1x256xf32>, i32 -> vector<1x256xf32>
    %248 = vector.broadcast %245 : f32 to vector<1x256xf32>
    %249 = arith.mulf %248, %247 : vector<1x256xf32>
    %c3_i32_57 = arith.constant 3 : i32
    %250 = tpu.dynamic_rotate %4 by %c3_i32_57 dim 1 : vector<1x256xf32>, i32 -> vector<1x256xf32>
    %251 = vector.broadcast %246 : f32 to vector<1x256xf32>
    %252 = arith.mulf %251, %250 : vector<1x256xf32>
    %253 = arith.addf %249, %252 : vector<1x256xf32>
    %254 = arith.mulf %253, %5 : vector<1x256xf32>
    %c22 = arith.constant 22 : index
    %255 = memref.load %arg2[%c22] : memref<98xf32, #tpu.memory_space<smem>>
    %c71 = arith.constant 71 : index
    %256 = memref.load %arg2[%c71] : memref<98xf32, #tpu.memory_space<smem>>
    %c2_i32_58 = arith.constant 2 : i32
    %257 = tpu.dynamic_rotate %3 by %c2_i32_58 dim 1 : vector<1x256xf32>, i32 -> vector<1x256xf32>
    %258 = vector.broadcast %255 : f32 to vector<1x256xf32>
    %259 = arith.mulf %258, %257 : vector<1x256xf32>
    %c2_i32_59 = arith.constant 2 : i32
    %260 = tpu.dynamic_rotate %4 by %c2_i32_59 dim 1 : vector<1x256xf32>, i32 -> vector<1x256xf32>
    %261 = vector.broadcast %256 : f32 to vector<1x256xf32>
    %262 = arith.mulf %261, %260 : vector<1x256xf32>
    %263 = arith.addf %259, %262 : vector<1x256xf32>
    %264 = arith.mulf %263, %6 : vector<1x256xf32>
    %265 = arith.addf %254, %264 : vector<1x256xf32>
    %c23 = arith.constant 23 : index
    %266 = memref.load %arg2[%c23] : memref<98xf32, #tpu.memory_space<smem>>
    %c72 = arith.constant 72 : index
    %267 = memref.load %arg2[%c72] : memref<98xf32, #tpu.memory_space<smem>>
    %c1_i32_60 = arith.constant 1 : i32
    %268 = tpu.dynamic_rotate %3 by %c1_i32_60 dim 1 : vector<1x256xf32>, i32 -> vector<1x256xf32>
    %269 = vector.broadcast %266 : f32 to vector<1x256xf32>
    %270 = arith.mulf %269, %268 : vector<1x256xf32>
    %c1_i32_61 = arith.constant 1 : i32
    %271 = tpu.dynamic_rotate %4 by %c1_i32_61 dim 1 : vector<1x256xf32>, i32 -> vector<1x256xf32>
    %272 = vector.broadcast %267 : f32 to vector<1x256xf32>
    %273 = arith.mulf %272, %271 : vector<1x256xf32>
    %274 = arith.addf %270, %273 : vector<1x256xf32>
    %275 = arith.mulf %274, %7 : vector<1x256xf32>
    %276 = arith.addf %265, %275 : vector<1x256xf32>
    %c24 = arith.constant 24 : index
    %277 = memref.load %arg2[%c24] : memref<98xf32, #tpu.memory_space<smem>>
    %c73 = arith.constant 73 : index
    %278 = memref.load %arg2[%c73] : memref<98xf32, #tpu.memory_space<smem>>
    %279 = vector.broadcast %277 : f32 to vector<1x256xf32>
    %280 = arith.mulf %279, %3 : vector<1x256xf32>
    %281 = vector.broadcast %278 : f32 to vector<1x256xf32>
    %282 = arith.mulf %281, %4 : vector<1x256xf32>
    %283 = arith.addf %280, %282 : vector<1x256xf32>
    %284 = arith.addf %276, %283 : vector<1x256xf32>
    %c25 = arith.constant 25 : index
    %285 = memref.load %arg2[%c25] : memref<98xf32, #tpu.memory_space<smem>>
    %c74 = arith.constant 74 : index
    %286 = memref.load %arg2[%c74] : memref<98xf32, #tpu.memory_space<smem>>
    %c255_i32_62 = arith.constant 255 : i32
    %287 = tpu.dynamic_rotate %3 by %c255_i32_62 dim 1 : vector<1x256xf32>, i32 -> vector<1x256xf32>
    %288 = vector.broadcast %285 : f32 to vector<1x256xf32>
    %289 = arith.mulf %288, %287 : vector<1x256xf32>
    %c255_i32_63 = arith.constant 255 : i32
    %290 = tpu.dynamic_rotate %4 by %c255_i32_63 dim 1 : vector<1x256xf32>, i32 -> vector<1x256xf32>
    %291 = vector.broadcast %286 : f32 to vector<1x256xf32>
    %292 = arith.mulf %291, %290 : vector<1x256xf32>
    %293 = arith.addf %289, %292 : vector<1x256xf32>
    %294 = arith.mulf %293, %8 : vector<1x256xf32>
    %295 = arith.addf %284, %294 : vector<1x256xf32>
    %c26 = arith.constant 26 : index
    %296 = memref.load %arg2[%c26] : memref<98xf32, #tpu.memory_space<smem>>
    %c75 = arith.constant 75 : index
    %297 = memref.load %arg2[%c75] : memref<98xf32, #tpu.memory_space<smem>>
    %c254_i32_64 = arith.constant 254 : i32
    %298 = tpu.dynamic_rotate %3 by %c254_i32_64 dim 1 : vector<1x256xf32>, i32 -> vector<1x256xf32>
    %299 = vector.broadcast %296 : f32 to vector<1x256xf32>
    %300 = arith.mulf %299, %298 : vector<1x256xf32>
    %c254_i32_65 = arith.constant 254 : i32
    %301 = tpu.dynamic_rotate %4 by %c254_i32_65 dim 1 : vector<1x256xf32>, i32 -> vector<1x256xf32>
    %302 = vector.broadcast %297 : f32 to vector<1x256xf32>
    %303 = arith.mulf %302, %301 : vector<1x256xf32>
    %304 = arith.addf %300, %303 : vector<1x256xf32>
    %305 = arith.mulf %304, %9 : vector<1x256xf32>
    %306 = arith.addf %295, %305 : vector<1x256xf32>
    %c27 = arith.constant 27 : index
    %307 = memref.load %arg2[%c27] : memref<98xf32, #tpu.memory_space<smem>>
    %c76 = arith.constant 76 : index
    %308 = memref.load %arg2[%c76] : memref<98xf32, #tpu.memory_space<smem>>
    %c253_i32_66 = arith.constant 253 : i32
    %309 = tpu.dynamic_rotate %3 by %c253_i32_66 dim 1 : vector<1x256xf32>, i32 -> vector<1x256xf32>
    %310 = vector.broadcast %307 : f32 to vector<1x256xf32>
    %311 = arith.mulf %310, %309 : vector<1x256xf32>
    %c253_i32_67 = arith.constant 253 : i32
    %312 = tpu.dynamic_rotate %4 by %c253_i32_67 dim 1 : vector<1x256xf32>, i32 -> vector<1x256xf32>
    %313 = vector.broadcast %308 : f32 to vector<1x256xf32>
    %314 = arith.mulf %313, %312 : vector<1x256xf32>
    %315 = arith.addf %311, %314 : vector<1x256xf32>
    %316 = arith.mulf %315, %10 : vector<1x256xf32>
    %317 = arith.addf %306, %316 : vector<1x256xf32>
    %c240_i32 = arith.constant 240 : i32
    %318 = tpu.dynamic_rotate %3 by %c240_i32 dim 1 : vector<1x256xf32>, i32 -> vector<1x256xf32>
    %c240_i32_68 = arith.constant 240 : i32
    %319 = tpu.dynamic_rotate %4 by %c240_i32_68 dim 1 : vector<1x256xf32>, i32 -> vector<1x256xf32>
    %c4_69 = arith.constant 4 : index
    %c0_70 = arith.constant 0 : index
    %320 = vector.load %arg3[%c4_69, %c0_70] : memref<7x256xf32, #tpu.memory_space<vmem>>, vector<1x256xf32>
    %321 = arith.mulf %318, %320 : vector<1x256xf32>
    %322 = arith.mulf %319, %320 : vector<1x256xf32>
    %c28 = arith.constant 28 : index
    %323 = memref.load %arg2[%c28] : memref<98xf32, #tpu.memory_space<smem>>
    %c77 = arith.constant 77 : index
    %324 = memref.load %arg2[%c77] : memref<98xf32, #tpu.memory_space<smem>>
    %c3_i32_71 = arith.constant 3 : i32
    %325 = tpu.dynamic_rotate %321 by %c3_i32_71 dim 1 : vector<1x256xf32>, i32 -> vector<1x256xf32>
    %326 = vector.broadcast %323 : f32 to vector<1x256xf32>
    %327 = arith.mulf %326, %325 : vector<1x256xf32>
    %c3_i32_72 = arith.constant 3 : i32
    %328 = tpu.dynamic_rotate %322 by %c3_i32_72 dim 1 : vector<1x256xf32>, i32 -> vector<1x256xf32>
    %329 = vector.broadcast %324 : f32 to vector<1x256xf32>
    %330 = arith.mulf %329, %328 : vector<1x256xf32>
    %331 = arith.addf %327, %330 : vector<1x256xf32>
    %332 = arith.mulf %331, %5 : vector<1x256xf32>
    %c29 = arith.constant 29 : index
    %333 = memref.load %arg2[%c29] : memref<98xf32, #tpu.memory_space<smem>>
    %c78 = arith.constant 78 : index
    %334 = memref.load %arg2[%c78] : memref<98xf32, #tpu.memory_space<smem>>
    %c2_i32_73 = arith.constant 2 : i32
    %335 = tpu.dynamic_rotate %321 by %c2_i32_73 dim 1 : vector<1x256xf32>, i32 -> vector<1x256xf32>
    %336 = vector.broadcast %333 : f32 to vector<1x256xf32>
    %337 = arith.mulf %336, %335 : vector<1x256xf32>
    %c2_i32_74 = arith.constant 2 : i32
    %338 = tpu.dynamic_rotate %322 by %c2_i32_74 dim 1 : vector<1x256xf32>, i32 -> vector<1x256xf32>
    %339 = vector.broadcast %334 : f32 to vector<1x256xf32>
    %340 = arith.mulf %339, %338 : vector<1x256xf32>
    %341 = arith.addf %337, %340 : vector<1x256xf32>
    %342 = arith.mulf %341, %6 : vector<1x256xf32>
    %343 = arith.addf %332, %342 : vector<1x256xf32>
    %c30 = arith.constant 30 : index
    %344 = memref.load %arg2[%c30] : memref<98xf32, #tpu.memory_space<smem>>
    %c79 = arith.constant 79 : index
    %345 = memref.load %arg2[%c79] : memref<98xf32, #tpu.memory_space<smem>>
    %c1_i32_75 = arith.constant 1 : i32
    %346 = tpu.dynamic_rotate %321 by %c1_i32_75 dim 1 : vector<1x256xf32>, i32 -> vector<1x256xf32>
    %347 = vector.broadcast %344 : f32 to vector<1x256xf32>
    %348 = arith.mulf %347, %346 : vector<1x256xf32>
    %c1_i32_76 = arith.constant 1 : i32
    %349 = tpu.dynamic_rotate %322 by %c1_i32_76 dim 1 : vector<1x256xf32>, i32 -> vector<1x256xf32>
    %350 = vector.broadcast %345 : f32 to vector<1x256xf32>
    %351 = arith.mulf %350, %349 : vector<1x256xf32>
    %352 = arith.addf %348, %351 : vector<1x256xf32>
    %353 = arith.mulf %352, %7 : vector<1x256xf32>
    %354 = arith.addf %343, %353 : vector<1x256xf32>
    %c31 = arith.constant 31 : index
    %355 = memref.load %arg2[%c31] : memref<98xf32, #tpu.memory_space<smem>>
    %c80 = arith.constant 80 : index
    %356 = memref.load %arg2[%c80] : memref<98xf32, #tpu.memory_space<smem>>
    %357 = vector.broadcast %355 : f32 to vector<1x256xf32>
    %358 = arith.mulf %357, %321 : vector<1x256xf32>
    %359 = vector.broadcast %356 : f32 to vector<1x256xf32>
    %360 = arith.mulf %359, %322 : vector<1x256xf32>
    %361 = arith.addf %358, %360 : vector<1x256xf32>
    %362 = arith.addf %354, %361 : vector<1x256xf32>
    %c32 = arith.constant 32 : index
    %363 = memref.load %arg2[%c32] : memref<98xf32, #tpu.memory_space<smem>>
    %c81 = arith.constant 81 : index
    %364 = memref.load %arg2[%c81] : memref<98xf32, #tpu.memory_space<smem>>
    %c255_i32_77 = arith.constant 255 : i32
    %365 = tpu.dynamic_rotate %321 by %c255_i32_77 dim 1 : vector<1x256xf32>, i32 -> vector<1x256xf32>
    %366 = vector.broadcast %363 : f32 to vector<1x256xf32>
    %367 = arith.mulf %366, %365 : vector<1x256xf32>
    %c255_i32_78 = arith.constant 255 : i32
    %368 = tpu.dynamic_rotate %322 by %c255_i32_78 dim 1 : vector<1x256xf32>, i32 -> vector<1x256xf32>
    %369 = vector.broadcast %364 : f32 to vector<1x256xf32>
    %370 = arith.mulf %369, %368 : vector<1x256xf32>
    %371 = arith.addf %367, %370 : vector<1x256xf32>
    %372 = arith.mulf %371, %8 : vector<1x256xf32>
    %373 = arith.addf %362, %372 : vector<1x256xf32>
    %c33 = arith.constant 33 : index
    %374 = memref.load %arg2[%c33] : memref<98xf32, #tpu.memory_space<smem>>
    %c82 = arith.constant 82 : index
    %375 = memref.load %arg2[%c82] : memref<98xf32, #tpu.memory_space<smem>>
    %c254_i32_79 = arith.constant 254 : i32
    %376 = tpu.dynamic_rotate %321 by %c254_i32_79 dim 1 : vector<1x256xf32>, i32 -> vector<1x256xf32>
    %377 = vector.broadcast %374 : f32 to vector<1x256xf32>
    %378 = arith.mulf %377, %376 : vector<1x256xf32>
    %c254_i32_80 = arith.constant 254 : i32
    %379 = tpu.dynamic_rotate %322 by %c254_i32_80 dim 1 : vector<1x256xf32>, i32 -> vector<1x256xf32>
    %380 = vector.broadcast %375 : f32 to vector<1x256xf32>
    %381 = arith.mulf %380, %379 : vector<1x256xf32>
    %382 = arith.addf %378, %381 : vector<1x256xf32>
    %383 = arith.mulf %382, %9 : vector<1x256xf32>
    %384 = arith.addf %373, %383 : vector<1x256xf32>
    %c34 = arith.constant 34 : index
    %385 = memref.load %arg2[%c34] : memref<98xf32, #tpu.memory_space<smem>>
    %c83 = arith.constant 83 : index
    %386 = memref.load %arg2[%c83] : memref<98xf32, #tpu.memory_space<smem>>
    %c253_i32_81 = arith.constant 253 : i32
    %387 = tpu.dynamic_rotate %321 by %c253_i32_81 dim 1 : vector<1x256xf32>, i32 -> vector<1x256xf32>
    %388 = vector.broadcast %385 : f32 to vector<1x256xf32>
    %389 = arith.mulf %388, %387 : vector<1x256xf32>
    %c253_i32_82 = arith.constant 253 : i32
    %390 = tpu.dynamic_rotate %322 by %c253_i32_82 dim 1 : vector<1x256xf32>, i32 -> vector<1x256xf32>
    %391 = vector.broadcast %386 : f32 to vector<1x256xf32>
    %392 = arith.mulf %391, %390 : vector<1x256xf32>
    %393 = arith.addf %389, %392 : vector<1x256xf32>
    %394 = arith.mulf %393, %10 : vector<1x256xf32>
    %395 = arith.addf %384, %394 : vector<1x256xf32>
    %c224_i32 = arith.constant 224 : i32
    %396 = tpu.dynamic_rotate %3 by %c224_i32 dim 1 : vector<1x256xf32>, i32 -> vector<1x256xf32>
    %c224_i32_83 = arith.constant 224 : i32
    %397 = tpu.dynamic_rotate %4 by %c224_i32_83 dim 1 : vector<1x256xf32>, i32 -> vector<1x256xf32>
    %c5_84 = arith.constant 5 : index
    %c0_85 = arith.constant 0 : index
    %398 = vector.load %arg3[%c5_84, %c0_85] : memref<7x256xf32, #tpu.memory_space<vmem>>, vector<1x256xf32>
    %399 = arith.mulf %396, %398 : vector<1x256xf32>
    %400 = arith.mulf %397, %398 : vector<1x256xf32>
    %c35 = arith.constant 35 : index
    %401 = memref.load %arg2[%c35] : memref<98xf32, #tpu.memory_space<smem>>
    %c84 = arith.constant 84 : index
    %402 = memref.load %arg2[%c84] : memref<98xf32, #tpu.memory_space<smem>>
    %c3_i32_86 = arith.constant 3 : i32
    %403 = tpu.dynamic_rotate %399 by %c3_i32_86 dim 1 : vector<1x256xf32>, i32 -> vector<1x256xf32>
    %404 = vector.broadcast %401 : f32 to vector<1x256xf32>
    %405 = arith.mulf %404, %403 : vector<1x256xf32>
    %c3_i32_87 = arith.constant 3 : i32
    %406 = tpu.dynamic_rotate %400 by %c3_i32_87 dim 1 : vector<1x256xf32>, i32 -> vector<1x256xf32>
    %407 = vector.broadcast %402 : f32 to vector<1x256xf32>
    %408 = arith.mulf %407, %406 : vector<1x256xf32>
    %409 = arith.addf %405, %408 : vector<1x256xf32>
    %410 = arith.mulf %409, %5 : vector<1x256xf32>
    %c36 = arith.constant 36 : index
    %411 = memref.load %arg2[%c36] : memref<98xf32, #tpu.memory_space<smem>>
    %c85 = arith.constant 85 : index
    %412 = memref.load %arg2[%c85] : memref<98xf32, #tpu.memory_space<smem>>
    %c2_i32_88 = arith.constant 2 : i32
    %413 = tpu.dynamic_rotate %399 by %c2_i32_88 dim 1 : vector<1x256xf32>, i32 -> vector<1x256xf32>
    %414 = vector.broadcast %411 : f32 to vector<1x256xf32>
    %415 = arith.mulf %414, %413 : vector<1x256xf32>
    %c2_i32_89 = arith.constant 2 : i32
    %416 = tpu.dynamic_rotate %400 by %c2_i32_89 dim 1 : vector<1x256xf32>, i32 -> vector<1x256xf32>
    %417 = vector.broadcast %412 : f32 to vector<1x256xf32>
    %418 = arith.mulf %417, %416 : vector<1x256xf32>
    %419 = arith.addf %415, %418 : vector<1x256xf32>
    %420 = arith.mulf %419, %6 : vector<1x256xf32>
    %421 = arith.addf %410, %420 : vector<1x256xf32>
    %c37 = arith.constant 37 : index
    %422 = memref.load %arg2[%c37] : memref<98xf32, #tpu.memory_space<smem>>
    %c86 = arith.constant 86 : index
    %423 = memref.load %arg2[%c86] : memref<98xf32, #tpu.memory_space<smem>>
    %c1_i32_90 = arith.constant 1 : i32
    %424 = tpu.dynamic_rotate %399 by %c1_i32_90 dim 1 : vector<1x256xf32>, i32 -> vector<1x256xf32>
    %425 = vector.broadcast %422 : f32 to vector<1x256xf32>
    %426 = arith.mulf %425, %424 : vector<1x256xf32>
    %c1_i32_91 = arith.constant 1 : i32
    %427 = tpu.dynamic_rotate %400 by %c1_i32_91 dim 1 : vector<1x256xf32>, i32 -> vector<1x256xf32>
    %428 = vector.broadcast %423 : f32 to vector<1x256xf32>
    %429 = arith.mulf %428, %427 : vector<1x256xf32>
    %430 = arith.addf %426, %429 : vector<1x256xf32>
    %431 = arith.mulf %430, %7 : vector<1x256xf32>
    %432 = arith.addf %421, %431 : vector<1x256xf32>
    %c38 = arith.constant 38 : index
    %433 = memref.load %arg2[%c38] : memref<98xf32, #tpu.memory_space<smem>>
    %c87 = arith.constant 87 : index
    %434 = memref.load %arg2[%c87] : memref<98xf32, #tpu.memory_space<smem>>
    %435 = vector.broadcast %433 : f32 to vector<1x256xf32>
    %436 = arith.mulf %435, %399 : vector<1x256xf32>
    %437 = vector.broadcast %434 : f32 to vector<1x256xf32>
    %438 = arith.mulf %437, %400 : vector<1x256xf32>
    %439 = arith.addf %436, %438 : vector<1x256xf32>
    %440 = arith.addf %432, %439 : vector<1x256xf32>
    %c39 = arith.constant 39 : index
    %441 = memref.load %arg2[%c39] : memref<98xf32, #tpu.memory_space<smem>>
    %c88 = arith.constant 88 : index
    %442 = memref.load %arg2[%c88] : memref<98xf32, #tpu.memory_space<smem>>
    %c255_i32_92 = arith.constant 255 : i32
    %443 = tpu.dynamic_rotate %399 by %c255_i32_92 dim 1 : vector<1x256xf32>, i32 -> vector<1x256xf32>
    %444 = vector.broadcast %441 : f32 to vector<1x256xf32>
    %445 = arith.mulf %444, %443 : vector<1x256xf32>
    %c255_i32_93 = arith.constant 255 : i32
    %446 = tpu.dynamic_rotate %400 by %c255_i32_93 dim 1 : vector<1x256xf32>, i32 -> vector<1x256xf32>
    %447 = vector.broadcast %442 : f32 to vector<1x256xf32>
    %448 = arith.mulf %447, %446 : vector<1x256xf32>
    %449 = arith.addf %445, %448 : vector<1x256xf32>
    %450 = arith.mulf %449, %8 : vector<1x256xf32>
    %451 = arith.addf %440, %450 : vector<1x256xf32>
    %c40 = arith.constant 40 : index
    %452 = memref.load %arg2[%c40] : memref<98xf32, #tpu.memory_space<smem>>
    %c89 = arith.constant 89 : index
    %453 = memref.load %arg2[%c89] : memref<98xf32, #tpu.memory_space<smem>>
    %c254_i32_94 = arith.constant 254 : i32
    %454 = tpu.dynamic_rotate %399 by %c254_i32_94 dim 1 : vector<1x256xf32>, i32 -> vector<1x256xf32>
    %455 = vector.broadcast %452 : f32 to vector<1x256xf32>
    %456 = arith.mulf %455, %454 : vector<1x256xf32>
    %c254_i32_95 = arith.constant 254 : i32
    %457 = tpu.dynamic_rotate %400 by %c254_i32_95 dim 1 : vector<1x256xf32>, i32 -> vector<1x256xf32>
    %458 = vector.broadcast %453 : f32 to vector<1x256xf32>
    %459 = arith.mulf %458, %457 : vector<1x256xf32>
    %460 = arith.addf %456, %459 : vector<1x256xf32>
    %461 = arith.mulf %460, %9 : vector<1x256xf32>
    %462 = arith.addf %451, %461 : vector<1x256xf32>
    %c41 = arith.constant 41 : index
    %463 = memref.load %arg2[%c41] : memref<98xf32, #tpu.memory_space<smem>>
    %c90 = arith.constant 90 : index
    %464 = memref.load %arg2[%c90] : memref<98xf32, #tpu.memory_space<smem>>
    %c253_i32_96 = arith.constant 253 : i32
    %465 = tpu.dynamic_rotate %399 by %c253_i32_96 dim 1 : vector<1x256xf32>, i32 -> vector<1x256xf32>
    %466 = vector.broadcast %463 : f32 to vector<1x256xf32>
    %467 = arith.mulf %466, %465 : vector<1x256xf32>
    %c253_i32_97 = arith.constant 253 : i32
    %468 = tpu.dynamic_rotate %400 by %c253_i32_97 dim 1 : vector<1x256xf32>, i32 -> vector<1x256xf32>
    %469 = vector.broadcast %464 : f32 to vector<1x256xf32>
    %470 = arith.mulf %469, %468 : vector<1x256xf32>
    %471 = arith.addf %467, %470 : vector<1x256xf32>
    %472 = arith.mulf %471, %10 : vector<1x256xf32>
    %473 = arith.addf %462, %472 : vector<1x256xf32>
    %c208_i32 = arith.constant 208 : i32
    %474 = tpu.dynamic_rotate %3 by %c208_i32 dim 1 : vector<1x256xf32>, i32 -> vector<1x256xf32>
    %c208_i32_98 = arith.constant 208 : i32
    %475 = tpu.dynamic_rotate %4 by %c208_i32_98 dim 1 : vector<1x256xf32>, i32 -> vector<1x256xf32>
    %c6_99 = arith.constant 6 : index
    %c0_100 = arith.constant 0 : index
    %476 = vector.load %arg3[%c6_99, %c0_100] : memref<7x256xf32, #tpu.memory_space<vmem>>, vector<1x256xf32>
    %477 = arith.mulf %474, %476 : vector<1x256xf32>
    %478 = arith.mulf %475, %476 : vector<1x256xf32>
    %c42 = arith.constant 42 : index
    %479 = memref.load %arg2[%c42] : memref<98xf32, #tpu.memory_space<smem>>
    %c91 = arith.constant 91 : index
    %480 = memref.load %arg2[%c91] : memref<98xf32, #tpu.memory_space<smem>>
    %c3_i32_101 = arith.constant 3 : i32
    %481 = tpu.dynamic_rotate %477 by %c3_i32_101 dim 1 : vector<1x256xf32>, i32 -> vector<1x256xf32>
    %482 = vector.broadcast %479 : f32 to vector<1x256xf32>
    %483 = arith.mulf %482, %481 : vector<1x256xf32>
    %c3_i32_102 = arith.constant 3 : i32
    %484 = tpu.dynamic_rotate %478 by %c3_i32_102 dim 1 : vector<1x256xf32>, i32 -> vector<1x256xf32>
    %485 = vector.broadcast %480 : f32 to vector<1x256xf32>
    %486 = arith.mulf %485, %484 : vector<1x256xf32>
    %487 = arith.addf %483, %486 : vector<1x256xf32>
    %488 = arith.mulf %487, %5 : vector<1x256xf32>
    %c43 = arith.constant 43 : index
    %489 = memref.load %arg2[%c43] : memref<98xf32, #tpu.memory_space<smem>>
    %c92 = arith.constant 92 : index
    %490 = memref.load %arg2[%c92] : memref<98xf32, #tpu.memory_space<smem>>
    %c2_i32_103 = arith.constant 2 : i32
    %491 = tpu.dynamic_rotate %477 by %c2_i32_103 dim 1 : vector<1x256xf32>, i32 -> vector<1x256xf32>
    %492 = vector.broadcast %489 : f32 to vector<1x256xf32>
    %493 = arith.mulf %492, %491 : vector<1x256xf32>
    %c2_i32_104 = arith.constant 2 : i32
    %494 = tpu.dynamic_rotate %478 by %c2_i32_104 dim 1 : vector<1x256xf32>, i32 -> vector<1x256xf32>
    %495 = vector.broadcast %490 : f32 to vector<1x256xf32>
    %496 = arith.mulf %495, %494 : vector<1x256xf32>
    %497 = arith.addf %493, %496 : vector<1x256xf32>
    %498 = arith.mulf %497, %6 : vector<1x256xf32>
    %499 = arith.addf %488, %498 : vector<1x256xf32>
    %c44 = arith.constant 44 : index
    %500 = memref.load %arg2[%c44] : memref<98xf32, #tpu.memory_space<smem>>
    %c93 = arith.constant 93 : index
    %501 = memref.load %arg2[%c93] : memref<98xf32, #tpu.memory_space<smem>>
    %c1_i32_105 = arith.constant 1 : i32
    %502 = tpu.dynamic_rotate %477 by %c1_i32_105 dim 1 : vector<1x256xf32>, i32 -> vector<1x256xf32>
    %503 = vector.broadcast %500 : f32 to vector<1x256xf32>
    %504 = arith.mulf %503, %502 : vector<1x256xf32>
    %c1_i32_106 = arith.constant 1 : i32
    %505 = tpu.dynamic_rotate %478 by %c1_i32_106 dim 1 : vector<1x256xf32>, i32 -> vector<1x256xf32>
    %506 = vector.broadcast %501 : f32 to vector<1x256xf32>
    %507 = arith.mulf %506, %505 : vector<1x256xf32>
    %508 = arith.addf %504, %507 : vector<1x256xf32>
    %509 = arith.mulf %508, %7 : vector<1x256xf32>
    %510 = arith.addf %499, %509 : vector<1x256xf32>
    %c45 = arith.constant 45 : index
    %511 = memref.load %arg2[%c45] : memref<98xf32, #tpu.memory_space<smem>>
    %c94 = arith.constant 94 : index
    %512 = memref.load %arg2[%c94] : memref<98xf32, #tpu.memory_space<smem>>
    %513 = vector.broadcast %511 : f32 to vector<1x256xf32>
    %514 = arith.mulf %513, %477 : vector<1x256xf32>
    %515 = vector.broadcast %512 : f32 to vector<1x256xf32>
    %516 = arith.mulf %515, %478 : vector<1x256xf32>
    %517 = arith.addf %514, %516 : vector<1x256xf32>
    %518 = arith.addf %510, %517 : vector<1x256xf32>
    %c46 = arith.constant 46 : index
    %519 = memref.load %arg2[%c46] : memref<98xf32, #tpu.memory_space<smem>>
    %c95 = arith.constant 95 : index
    %520 = memref.load %arg2[%c95] : memref<98xf32, #tpu.memory_space<smem>>
    %c255_i32_107 = arith.constant 255 : i32
    %521 = tpu.dynamic_rotate %477 by %c255_i32_107 dim 1 : vector<1x256xf32>, i32 -> vector<1x256xf32>
    %522 = vector.broadcast %519 : f32 to vector<1x256xf32>
    %523 = arith.mulf %522, %521 : vector<1x256xf32>
    %c255_i32_108 = arith.constant 255 : i32
    %524 = tpu.dynamic_rotate %478 by %c255_i32_108 dim 1 : vector<1x256xf32>, i32 -> vector<1x256xf32>
    %525 = vector.broadcast %520 : f32 to vector<1x256xf32>
    %526 = arith.mulf %525, %524 : vector<1x256xf32>
    %527 = arith.addf %523, %526 : vector<1x256xf32>
    %528 = arith.mulf %527, %8 : vector<1x256xf32>
    %529 = arith.addf %518, %528 : vector<1x256xf32>
    %c47 = arith.constant 47 : index
    %530 = memref.load %arg2[%c47] : memref<98xf32, #tpu.memory_space<smem>>
    %c96 = arith.constant 96 : index
    %531 = memref.load %arg2[%c96] : memref<98xf32, #tpu.memory_space<smem>>
    %c254_i32_109 = arith.constant 254 : i32
    %532 = tpu.dynamic_rotate %477 by %c254_i32_109 dim 1 : vector<1x256xf32>, i32 -> vector<1x256xf32>
    %533 = vector.broadcast %530 : f32 to vector<1x256xf32>
    %534 = arith.mulf %533, %532 : vector<1x256xf32>
    %c254_i32_110 = arith.constant 254 : i32
    %535 = tpu.dynamic_rotate %478 by %c254_i32_110 dim 1 : vector<1x256xf32>, i32 -> vector<1x256xf32>
    %536 = vector.broadcast %531 : f32 to vector<1x256xf32>
    %537 = arith.mulf %536, %535 : vector<1x256xf32>
    %538 = arith.addf %534, %537 : vector<1x256xf32>
    %539 = arith.mulf %538, %9 : vector<1x256xf32>
    %540 = arith.addf %529, %539 : vector<1x256xf32>
    %c48 = arith.constant 48 : index
    %541 = memref.load %arg2[%c48] : memref<98xf32, #tpu.memory_space<smem>>
    %c97 = arith.constant 97 : index
    %542 = memref.load %arg2[%c97] : memref<98xf32, #tpu.memory_space<smem>>
    %c253_i32_111 = arith.constant 253 : i32
    %543 = tpu.dynamic_rotate %477 by %c253_i32_111 dim 1 : vector<1x256xf32>, i32 -> vector<1x256xf32>
    %544 = vector.broadcast %541 : f32 to vector<1x256xf32>
    %545 = arith.mulf %544, %543 : vector<1x256xf32>
    %c253_i32_112 = arith.constant 253 : i32
    %546 = tpu.dynamic_rotate %478 by %c253_i32_112 dim 1 : vector<1x256xf32>, i32 -> vector<1x256xf32>
    %547 = vector.broadcast %542 : f32 to vector<1x256xf32>
    %548 = arith.mulf %547, %546 : vector<1x256xf32>
    %549 = arith.addf %545, %548 : vector<1x256xf32>
    %550 = arith.mulf %549, %10 : vector<1x256xf32>
    %551 = arith.addf %540, %550 : vector<1x256xf32>
    %552 = arith.addf %88, %166 : vector<1x256xf32>
    %553 = arith.addf %552, %244 : vector<1x256xf32>
    %554 = arith.addf %553, %317 : vector<1x256xf32>
    %555 = arith.addf %554, %395 : vector<1x256xf32>
    %556 = arith.addf %555, %473 : vector<1x256xf32>
    %557 = arith.addf %556, %551 : vector<1x256xf32>
    %558 = arith.negf %557 : vector<1x256xf32>
    %559 = math.exp %558 : vector<1x256xf32>
    %cst_113 = arith.constant 1.000000e+00 : f32
    %560 = vector.broadcast %cst_113 : f32 to vector<1x256xf32>
    %561 = arith.addf %560, %559 : vector<1x256xf32>
    %562 = arith.divf %560, %561 : vector<1x256xf32>
    %563 = vector.shape_cast %562 : vector<1x256xf32> to vector<1x1x256xf32>
    %c0_114 = arith.constant 0 : index
    %c0_115 = arith.constant 0 : index
    %c0_116 = arith.constant 0 : index
    %564 = vector.load %arg5[%c0_114, %c0_115, %c0_116] : memref<1x1x256xf32, #tpu.memory_space<vmem>>, vector<1x1x256xf32>
    tpu.vector_store %arg5[%c0_114, %c0_115, %c0_116], %563 {strides = array<i32>} : memref<1x1x256xf32, #tpu.memory_space<vmem>>, vector<1x1x256xf32>,
    return
  }
  func.func @transform_0(%arg0: i32) -> (i32, i32, i32) {
    %c0_i32 = arith.constant 0 : i32
    %c0_i32_0 = arith.constant 0 : i32
    %c0_i32_1 = arith.constant 0 : i32
    return %arg0, %c0_i32, %c0_i32_0 : i32, i32, i32
  }
  func.func @transform_1(%arg0: i32) -> i32 {
    %c0_i32 = arith.constant 0 : i32
    %c0_i32_0 = arith.constant 0 : i32
    return %c0_i32 : i32
  }
  func.func @transform_2(%arg0: i32) -> (i32, i32) {
    %c0_i32 = arith.constant 0 : i32
    %c0_i32_0 = arith.constant 0 : i32
    %c0_i32_1 = arith.constant 0 : i32
    return %c0_i32, %c0_i32_0 : i32, i32
  }
  func.func @transform_3(%arg0: i32) -> (i32, i32) {
    %c0_i32 = arith.constant 0 : i32
    %c0_i32_0 = arith.constant 0 : i32
    %c0_i32_1 = arith.constant 0 : i32
    return %c0_i32, %c0_i32_0 : i32, i32
  }
  func.func @transform_4(%arg0: i32) -> (i32, i32, i32) {
    %c0_i32 = arith.constant 0 : i32
    %c0_i32_0 = arith.constant 0 : i32
    %c0_i32_1 = arith.constant 0 : i32
    return %arg0, %c0_i32, %c0_i32_0 : i32, i32, i32
  }
}

</mosaic_0001>

<llo_original>
// kernel: tpu_custom_call.1
$region0: #{tpu_custom_call.1}
  #allocation0 [shape = 'u32[]', space=smem, size = 0x4, offset = 0x4, fixed_abs, tag = 'smem constant byte address 0x4 - core index']
  #allocation1 [shape = 'u32[144,128]{1,0:T(1,128)}', space=vmem, size = 0x12000, scoped, tag = 'internal scratch']
  %s0 = inlined_call_operand.hbm [shape: f32[2,4,256], index: 0, kind: input, shape index: {}]
  %s1 = inlined_call_operand.vmem [shape: f32[98], index: 1, kind: input, shape index: {}]
  %s2 = inlined_call_operand.hbm [shape: f32[7,256], index: 2, kind: input, shape index: {}]
  %s3 = inlined_call_operand.hbm [shape: f32[7,256], index: 3, kind: input, shape index: {}]
  %s4 = inlined_call_operand.hbm [shape: f32[2,1,256], index: 4, kind: output, shape index: {}]
  %s5 = sld [smem:[#allocation0]]
  $region65: #{tpu_custom_call.1} parent=0
    _
  %s7 = ssub.s32 1, %s5
  %s8 = scalar_select 0, %s7, %s5
  $region1: #{tpu_custom_call.1} parent=0
    #allocation2 [shape = 'u8[8192]{0}', space=vmem, size = 0x2000, scoped, tag = 'input window, operand 0']
    #allocation3 [shape = 's32[2]{0}', space=sflag, size = 0x8, scoped, tag = 'scoped memory for tpu_custom_call.1']
    #allocation4 [shape = 's32[2]{0}', space=sflag, size = 0x8, scoped, tag = 'scoped memory for tpu_custom_call.1']
    #allocation5 [shape = 's32[2]{0}', space=sflag, size = 0x8, scoped, tag = 'scoped memory for tpu_custom_call.1']
    #allocation6 [shape = 'u8[512]{0}', space=smem, size = 0x200, scoped, tag = 'input window, operand 1, single buffered']
    #allocation7 [shape = 'u8[8192]{0}', space=vmem, size = 0x2000, scoped, tag = 'input window, operand 2, single buffered']
    #allocation8 [shape = 's32[1]{0}', space=sflag, size = 0x4, scoped, tag = 'scoped memory for tpu_custom_call.1']
    #allocation9 [shape = 'u8[8192]{0}', space=vmem, size = 0x2000, scoped, tag = 'input window, operand 3, single buffered']
    #allocation10 [shape = 'u8[2048]{0}', space=vmem, size = 0x800, scoped, tag = 'output window, operand 0']
    %9 = vsyncpa [#allocation3], 0
    %s10 = scalar_lea.sflag [#allocation3], 1
    %11 = vsyncpa %s10, 0
    %12 = vsyncpa [#allocation5], 0
    %13 = vsyncpa [#allocation8], 0
    %14 = vsyncpa [#allocation4], 0
    %s15 = scalar_lea.sflag [#allocation4], 1
    %16 = vsyncpa %s15, 0
    loop: start=0, step=1, limit=4
    $region2: #{tpu_custom_call.1} parent=1 // loop_pre_header
      _
    $region3: #{tpu_custom_call.1} parent=1 // loop_header
      %s18 = sphi 0, %s22
      %p19 = scmp.ge.s32.totalorder %s18, 4
      %s28 = sphi 0, %s30
      %s31 = sphi 0, %s28
      %s32 = sphi 0, %s31
      %s48 = sphi 0, %s32
      %s52 = sphi 0, %s52
      %s54 = sphi 0, %s52
      %s55 = sphi 0, %s54
      %s69 = sphi 0, %s55
      %s73 = sphi 0, %s73
      %s75 = sphi 0, %s73
      %s76 = sphi 0, %s75
      %s90 = sphi 0, %s76
      %s94 = sphi 0, %s94
      %s96 = sphi 0, %s94
      %s97 = sphi 0, %s96
      %s111 = sphi 0, %s97
      %s117 = sphi 0, %s119
      %s120 = sphi 0, %s117
      %s121 = sphi 0, %s120
      %s137 = sphi 0, %s121
    $region4: #{tpu_custom_call.1} parent=1 // loop_header_branch
      %21 = sbr.rel (%p19) target = $region8
    $region5: #{tpu_custom_call.1} parent=1 // loop_body
      %s23 = ssub.s32 %s18, 1
      %s24 = ssub.s32 %s18, 2
      %s25 = sadd.s32 %s18, 1
      %s26 = ssub.s32 %s18, %s25
      %p27 = scmp.eq.s32.totalorder %s26, 0
      %s29 = sadd.s32 %s28, 1
      %s30 = scalar_select %p27, %s28, %s29
      %p33 = pneg %p27
      %p34 = scmp.eq.s32.totalorder %s18, 1
      %p35 = por %p33, %p34
      %p36 = scmp.ne.s32.totalorder %s28, %s31
      %p37 = scmp.eq.s32.totalorder %s18, 0
      %p38 = por %p36, %p37
      %p39 = scmp.ne.s32.totalorder %s28, %s31
      %p40 = scmp.eq.s32.totalorder %s23, 1
      %p41 = por %p39, %p40
      %p42 = scmp.ne.s32.totalorder %s31, %s32
      %p43 = scmp.eq.s32.totalorder %s23, 0
      %p44 = por %p42, %p43
      %p45 = scmp.ne.s32.totalorder %s31, %s32
      %p46 = scmp.eq.s32.totalorder %s24, 1
      %p47 = por %p45, %p46
      %p49 = scmp.ne.s32.totalorder %s32, %s48
      %p50 = scmp.eq.s32.totalorder %s24, 0
      %p51 = por %p49, %p50
      %s53 = sadd.s32 %s52, 1
      %p56 = scmp.eq.s32.totalorder %s18, 1
      %p57 = scmp.ne.s32.totalorder %s52, %s54
      %p58 = scmp.eq.s32.totalorder %s18, 0
      %p59 = por %p57, %p58
      %p60 = scmp.ne.s32.totalorder %s52, %s54
      %p61 = scmp.eq.s32.totalorder %s23, 1
      %p62 = por %p60, %p61
      %p63 = scmp.ne.s32.totalorder %s54, %s55
      %p64 = scmp.eq.s32.totalorder %s23, 0
      %p65 = por %p63, %p64
      %p66 = scmp.ne.s32.totalorder %s54, %s55
      %p67 = scmp.eq.s32.totalorder %s24, 1
      %p68 = por %p66, %p67
      %p70 = scmp.ne.s32.totalorder %s55, %s69
      %p71 = scmp.eq.s32.totalorder %s24, 0
      %p72 = por %p70, %p71
      %s74 = sadd.s32 %s73, 1
      %p77 = scmp.eq.s32.totalorder %s18, 1
      %p78 = scmp.ne.s32.totalorder %s73, %s75
      %p79 = scmp.eq.s32.totalorder %s18, 0
      %p80 = por %p78, %p79
      %p81 = scmp.ne.s32.totalorder %s73, %s75
      %p82 = scmp.eq.s32.totalorder %s23, 1
      %p83 = por %p81, %p82
      %p84 = scmp.ne.s32.totalorder %s75, %s76
      %p85 = scmp.eq.s32.totalorder %s23, 0
      %p86 = por %p84, %p85
      %p87 = scmp.ne.s32.totalorder %s75, %s76
      %p88 = scmp.eq.s32.totalorder %s24, 1
      %p89 = por %p87, %p88
      %p91 = scmp.ne.s32.totalorder %s76, %s90
      %p92 = scmp.eq.s32.totalorder %s24, 0
      %p93 = por %p91, %p92
      %s95 = sadd.s32 %s94, 1
      %p98 = scmp.eq.s32.totalorder %s18, 1
      %p99 = scmp.ne.s32.totalorder %s94, %s96
      %p100 = scmp.eq.s32.totalorder %s18, 0
      %p101 = por %p99, %p100
      %p102 = scmp.ne.s32.totalorder %s94, %s96
      %p103 = scmp.eq.s32.totalorder %s23, 1
      %p104 = por %p102, %p103
      %p105 = scmp.ne.s32.totalorder %s96, %s97
      %p106 = scmp.eq.s32.totalorder %s23, 0
      %p107 = por %p105, %p106
      %p108 = scmp.ne.s32.totalorder %s96, %s97
      %p109 = scmp.eq.s32.totalorder %s24, 1
      %p110 = por %p108, %p109
      %p112 = scmp.ne.s32.totalorder %s97, %s111
      %p113 = scmp.eq.s32.totalorder %s24, 0
      %p114 = por %p112, %p113
      %s115 = ssub.s32 %s18, %s25
      %p116 = scmp.eq.s32.totalorder %s115, 0
      %s118 = sadd.s32 %s117, 1
      %s119 = scalar_select %p116, %s117, %s118
      %p122 = pneg %p116
      %p123 = scmp.eq.s32.totalorder %s18, 1
      %p124 = por %p122, %p123
      %p125 = scmp.ne.s32.totalorder %s117, %s120
      %p126 = scmp.eq.s32.totalorder %s18, 0
      %p127 = por %p125, %p126
      %p128 = scmp.ne.s32.totalorder %s117, %s120
      %p129 = scmp.eq.s32.totalorder %s23, 1
      %p130 = por %p128, %p129
      %p131 = scmp.ne.s32.totalorder %s120, %s121
      %p132 = scmp.eq.s32.totalorder %s23, 0
      %p133 = por %p131, %p132
      %p134 = scmp.ne.s32.totalorder %s120, %s121
      %p135 = scmp.eq.s32.totalorder %s24, 1
      %p136 = por %p134, %p135
      %p138 = scmp.ne.s32.totalorder %s121, %s137
      %p139 = scmp.eq.s32.totalorder %s24, 0
      %p140 = por %p138, %p139
      %p141 = scmp.le.s32.totalorder 1, %s18
      %p142 = scmp.lt.s32.totalorder %s18, 3
      %p143 = pnand %p141, %p142
      %p144 = pneg %p143
      // Predicated region
      $region9: #{tpu_custom_call.1} parent=5 // pred_check
        _
      $region10: #{tpu_custom_call.1} parent=5 // pred_check_branch
        %146 = sbr.rel (%p143) target = $region12
      $region11: #{tpu_custom_call.1} parent=5 // pred_region
        %s147 = ssub.s32 %s18, 1
        // Predicated region
        $region13: #{tpu_custom_call.1} parent=11 // pred_check
          %p148 = pneg %p65
        $region14: #{tpu_custom_call.1} parent=11 // pred_check_branch
          %150 = sbr.rel (%p148) target = $region16
        $region15: #{tpu_custom_call.1} parent=11 // pred_region
          %s152 = ssub.s32 16, 16
          %153 = vsyncadd [#allocation5], %s152
          %s155 = sshll.u32 %s1, 4
          %s156 = int_to_ptr.vmem [resolvable:$true] %s155
          %158 = dma.vmem_to_smem %s156, 16, [#allocation6], [#allocation5]
        $region16: #{tpu_custom_call.1} parent=11 // pred_fallthru
          _
        // Predicated region
        $region17: #{tpu_custom_call.1} parent=11 // pred_check
          %p159 = pneg %p86
        $region18: #{tpu_custom_call.1} parent=11 // pred_check_branch
          %161 = sbr.rel (%p159) target = $region20
        $region19: #{tpu_custom_call.1} parent=11 // pred_region
          %s163 = ssub.s32 256, 256
          %164 = vsyncadd [#allocation8], %s163
          %s166 = sshll.u32 [#allocation7], 4
          %s167 = int_to_ptr.vmem [resolvable:$true] %s166
          %169 = dma.hbm_to_vmem [thread:$0]  %s2, 256, %s167, [#allocation8]
        $region20: #{tpu_custom_call.1} parent=11 // pred_fallthru
          _
        // Predicated region
        $region21: #{tpu_custom_call.1} parent=11 // pred_check
          %p170 = pneg %p107
        $region22: #{tpu_custom_call.1} parent=11 // pred_check_branch
          %172 = sbr.rel (%p170) target = $region24
        $region23: #{tpu_custom_call.1} parent=11 // pred_region
          %s174 = ssub.s32 256, 256
          %175 = vsyncadd [#allocation8], %s174
          %s177 = sshll.u32 [#allocation9], 4
          %s178 = int_to_ptr.vmem [resolvable:$true] %s177
          %180 = dma.hbm_to_vmem [thread:$0]  %s3, 256, %s178, [#allocation8]
        $region24: #{tpu_custom_call.1} parent=11 // pred_fallthru
          _
      $region12: #{tpu_custom_call.1} parent=5 // pred_fallthru
        _
      %p181 = scmp.lt.s32.totalorder %s18, 2
      // Predicated region
      $region25: #{tpu_custom_call.1} parent=5 // pred_check
        %p182 = pneg %p181
      $region26: #{tpu_custom_call.1} parent=5 // pred_check_branch
        %184 = sbr.rel (%p182) target = $region28
      $region27: #{tpu_custom_call.1} parent=5 // pred_region
        // Predicated region
        $region29: #{tpu_custom_call.1} parent=27 // pred_check
          %p185 = pneg %p38
        $region30: #{tpu_custom_call.1} parent=27 // pred_check_branch
          %187 = sbr.rel (%p185) target = $region32
        $region31: #{tpu_custom_call.1} parent=27 // pred_region
          %s188 = sand.u32 %s28, 1
          %s189 = scalar_lea.sflag [#allocation3], %s188
          %s190 = sand.u32 %s28, 1
          %s191 = smul.addr %s190, 8
          %s192 = scalar_lea.vmem [#allocation2], %s191
          %s194 = ssub.s32 128, 128
          %195 = vsyncadd %s189, %s194
          %s196 = smul.addr %s18, 2
          %s197 = smul.addr %s196, 64
          %s198 = scalar_lea.hbm %s0, %s197
          %s200 = sshll.u32 %s192, 4
          %s201 = int_to_ptr.vmem [resolvable:$true] %s200
          %203 = dma.hbm_to_vmem [thread:$0]  %s198, 128, %s201, %s189
        $region32: #{tpu_custom_call.1} parent=27 // pred_fallthru
          _
      $region28: #{tpu_custom_call.1} parent=5 // pred_fallthru
        _
      %p204 = scmp.le.s32.totalorder 1, %s18
      %p205 = scmp.lt.s32.totalorder %s18, 3
      %p206 = pnand %p204, %p205
      %p207 = pneg %p206
      // Predicated region
      $region33: #{tpu_custom_call.1} parent=5 // pred_check
        _
      $region34: #{tpu_custom_call.1} parent=5 // pred_check_branch
        %209 = sbr.rel (%p206) target = $region36
      $region35: #{tpu_custom_call.1} parent=5 // pred_region
        %s210 = ssub.s32 %s18, 1
        %s211 = sand.u32 %s31, 1
        %s212 = scalar_lea.sflag [#allocation3], %s211
        %s213 = sand.u32 %s31, 1
        %s214 = smul.addr %s213, 8
        %s215 = scalar_lea.vmem [#allocation2], %s214
        // Predicated region
        $region37: #{tpu_custom_call.1} parent=35 // pred_check
          %p216 = pneg %p44
        $region38: #{tpu_custom_call.1} parent=35 // pred_check_branch
          %218 = sbr.rel (%p216) target = $region40
        $region39: #{tpu_custom_call.1} parent=35 // pred_region
          %219 = dma.done %s212, 128
        $region40: #{tpu_custom_call.1} parent=35 // pred_fallthru
          _
        // Predicated region
        $region41: #{tpu_custom_call.1} parent=35 // pred_check
          %p220 = pneg %p65
        $region42: #{tpu_custom_call.1} parent=35 // pred_check_branch
          %222 = sbr.rel (%p220) target = $region44
        $region43: #{tpu_custom_call.1} parent=35 // pred_region
          %223 = dma.done [#allocation5], 16
        $region44: #{tpu_custom_call.1} parent=35 // pred_fallthru
          _
        // Predicated region
        $region45: #{tpu_custom_call.1} parent=35 // pred_check
          %p224 = pneg %p86
        $region46: #{tpu_custom_call.1} parent=35 // pred_check_branch
          %226 = sbr.rel (%p224) target = $region48
        $region47: #{tpu_custom_call.1} parent=35 // pred_region
          %227 = dma.done [#allocation8], 256
        $region48: #{tpu_custom_call.1} parent=35 // pred_fallthru
          _
        // Predicated region
        $region49: #{tpu_custom_call.1} parent=35 // pred_check
          %p228 = pneg %p107
        $region50: #{tpu_custom_call.1} parent=35 // pred_check_branch
          %230 = sbr.rel (%p228) target = $region52
        $region51: #{tpu_custom_call.1} parent=35 // pred_region
          %231 = dma.done [#allocation8], 256
        $region52: #{tpu_custom_call.1} parent=35 // pred_fallthru
          _
        %232 = sfence
        %s233 = sand.u32 %s31, 1
        %s234 = scalar_lea.sflag [#allocation3], %s233
        %s235 = sand.u32 %s31, 1
        %s236 = smul.addr %s235, 8
        %s237 = scalar_lea.vmem [#allocation2], %s236
        %p238 = pneg %p44
        %p239 = pneg %p41
        %p240 = pneg %p65
        %p241 = pneg %p62
        %p242 = pneg %p86
        %p243 = pneg %p83
        %p244 = pneg %p107
        %p245 = pneg %p104
        %p246 = pneg %p133
        %p247 = pneg %p130
        %s248 = sand.u32 %s120, 1
        %s249 = scalar_lea.sflag [#allocation4], %s248
        %s250 = sand.u32 %s120, 1
        %s251 = smul.addr %s250, 2
        %s252 = scalar_lea.vmem [#allocation10], %s251
        %v253 = vld [vmem:[%s215] sm:$0xff]
        %v255 = vcombine.high %v253, %v253
        %vm257 = vcmask 1043456
        %v258 = vsel %vm257, %v253, 0.0
        %v259 = vrot.slane %v258, 4
        %v260 = vadd.f32 %v258, %v259
        %v261 = vrot.slane %v260, 2
        %v262 = vadd.f32 %v260, %v261
        %v263 = vrot.slane %v262, 1
        %v264 = vadd.f32 %v262, %v263
        %v265 = vsel %vm257, %v255, 0.0
        %v266 = vrot.slane %v265, 4
        %v267 = vadd.f32 %v265, %v266
        %v268 = vrot.slane %v267, 2
        %v269 = vadd.f32 %v267, %v268
        %v270 = vrot.slane %v269, 1
        %v271 = vadd.f32 %v269, %v270
        %v272 = vrcp.pop 4.0
        %v273 = vmul.f32 %v264, %v272
        %v274 = vmul.f32 %v271, %v272
        %v275 = vsel %vm257, %v253, -inf
        %v276 = vrot.slane %v275, 4
        %v277 = vmax.f32 %v275, %v276
        %v278 = vrot.slane %v277, 2
        %v279 = vmax.f32 %v277, %v278
        %v280 = vrot.slane %v279, 1
        %v281 = vmax.f32 %v279, %v280
        %v282 = vsel %vm257, %v255, -inf
        %v283 = vrot.slane %v282, 4
        %v284 = vmax.f32 %v282, %v283
        %v285 = vrot.slane %v284, 2
        %v286 = vmax.f32 %v284, %v285
        %v287 = vrot.slane %v286, 1
        %v288 = vmax.f32 %v286, %v287
        %v289 = vld [vmem:[#allocation9] ss:$8 sm:$0x3]
        %s290 = scalar_lea.vmem [#allocation9], 1
        %v291 = vld [vmem:[%s290] ss:$8 sm:$0x3]
        %s292 = scalar_lea.vmem [#allocation9], 2
        %v293 = vld [vmem:[%s292] ss:$8 sm:$0x3]
        %s294 = scalar_lea.vmem [#allocation9], 4
        %v295 = vld [vmem:[%s294] ss:$8 sm:$0x3]
        %s296 = scalar_lea.vmem [#allocation9], 5
        %v297 = vld [vmem:[%s296] ss:$8 sm:$0x3]
        %s298 = scalar_lea.vmem [#allocation9], 6
        %v299 = vld [vmem:[%s298] ss:$8 sm:$0x3]
        %300 = vrot.lane.b32.xlu0 %v273, 48
        %v301 = vpop.permute.xlu0 %300
        %302 = vrot.lane.b32.xlu0 %v274, 48
        %v303 = vpop.permute.xlu0 %302
        %v304 = vlaneseq
        %v305 = vand.u32 %v304, 127
        %vm306 = vcmp.lt.s32.totalorder %v305, 48
        %v307 = vsel %vm306, %v301, %v303
        %v308 = vsel %vm306, %v303, %v301
        %309 = vrot.lane.b32.xlu0 %v281, 48
        %v310 = vpop.permute.xlu0 %309
        %311 = vrot.lane.b32.xlu0 %v288, 48
        %v312 = vpop.permute.xlu0 %311
        %v313 = vsel %vm306, %v310, %v312
        %v314 = vsel %vm306, %v312, %v310
        %v315 = vld [vmem:[#allocation7] ss:$8 sm:$0x3]
        %v317 = vlaneseq
        %v318 = vshrl.u32 %v317, 7
        %v319 = vsub.s32 0, %v318
        %v320 = vrot.slane %v315, %v319
        %v321 = vlaneseq
        %v322 = vshrl.u32 %v321, 7
        %v323 = vsub.s32 1, %v322
        %v324 = vrot.slane %v315, %v323
        %v327 = vmul.f32 %v308, %v320
        %v328 = vmul.f32 %v307, %v324
        %v329 = vmul.f32 %v314, %v320
        %v330 = vmul.f32 %v313, %v324
        %s331 = sld [smem:[#allocation6]]
        %s332 = sld [smem:[#allocation6 + $0x31]]
        %333 = vrot.lane.b32.xlu0 %v327, 3
        %v334 = vpop.permute.xlu0 %333
        %335 = vrot.lane.b32.xlu0 %v328, 3
        %v336 = vpop.permute.xlu0 %335
        %vm337 = vcmp.lt.s32.totalorder %v305, 3
        %v338 = vsel %vm337, %v334, %v336
        %v339 = vsel %vm337, %v336, %v334
        %v340 = vstv %s331
        %v341 = vmul.f32 %v340, %v339
        %v342 = vmul.f32 %v340, %v338
        %343 = vrot.lane.b32.xlu0 %v329, 3
        %v344 = vpop.permute.xlu0 %343
        %345 = vrot.lane.b32.xlu0 %v330, 3
        %v346 = vpop.permute.xlu0 %345
        %v347 = vsel %vm337, %v344, %v346
        %v348 = vsel %vm337, %v346, %v344
        %v349 = vstv %s332
        %v350 = vmul.f32 %v349, %v348
        %v351 = vmul.f32 %v349, %v347
        %v352 = vadd.f32 %v341, %v350
        %v353 = vadd.f32 %v342, %v351
        %v355 = vlaneseq
        %v356 = vshrl.u32 %v355, 7
        %v357 = vsub.s32 0, %v356
        %v358 = vrot.slane %v289, %v357
        %v359 = vlaneseq
        %v360 = vshrl.u32 %v359, 7
        %v361 = vsub.s32 1, %v360
        %v362 = vrot.slane %v289, %v361
        %v365 = vmul.f32 %v352, %v358
        %v366 = vmul.f32 %v353, %v362
        %s367 = sld [smem:[#allocation6 + $0x1]]
        %s368 = sld [smem:[#allocation6 + $0x32]]
        %369 = vrot.lane.b32.xlu0 %v327, 2
        %v370 = vpop.permute.xlu0 %369
        %371 = vrot.lane.b32.xlu0 %v328, 2
        %v372 = vpop.permute.xlu0 %371
        %vm373 = vcmp.lt.s32.totalorder %v305, 2
        %v374 = vsel %vm373, %v370, %v372
        %v375 = vsel %vm373, %v372, %v370
        %v376 = vstv %s367
        %v377 = vmul.f32 %v376, %v375
        %v378 = vmul.f32 %v376, %v374
        %379 = vrot.lane.b32.xlu0 %v329, 2
        %v380 = vpop.permute.xlu0 %379
        %381 = vrot.lane.b32.xlu0 %v330, 2
        %v382 = vpop.permute.xlu0 %381
        %v383 = vsel %vm373, %v380, %v382
        %v384 = vsel %vm373, %v382, %v380
        %v385 = vstv %s368
        %v386 = vmul.f32 %v385, %v384
        %v387 = vmul.f32 %v385, %v383
        %v388 = vadd.f32 %v377, %v386
        %v389 = vadd.f32 %v378, %v387
        %v391 = vlaneseq
        %v392 = vshrl.u32 %v391, 7
        %v393 = vsub.s32 0, %v392
        %v394 = vrot.slane %v291, %v393
        %v395 = vlaneseq
        %v396 = vshrl.u32 %v395, 7
        %v397 = vsub.s32 1, %v396
        %v398 = vrot.slane %v291, %v397
        %v401 = vmul.f32 %v388, %v394
        %v402 = vmul.f32 %v389, %v398
        %v403 = vadd.f32 %v365, %v401
        %v404 = vadd.f32 %v366, %v402
        %s405 = sld [smem:[#allocation6 + $0x2]]
        %s406 = sld [smem:[#allocation6 + $0x33]]
        %407 = vrot.lane.b32.xlu0 %v327, 1
        %v408 = vpop.permute.xlu0 %407
        %409 = vrot.lane.b32.xlu0 %v328, 1
        %v410 = vpop.permute.xlu0 %409
        %vm411 = vcmp.lt.s32.totalorder %v305, 1
        %v412 = vsel %vm411, %v408, %v410
        %v413 = vsel %vm411, %v410, %v408
        %v414 = vstv %s405
        %v415 = vmul.f32 %v414, %v413
        %v416 = vmul.f32 %v414, %v412
        %417 = vrot.lane.b32.xlu0 %v329, 1
        %v418 = vpop.permute.xlu0 %417
        %419 = vrot.lane.b32.xlu0 %v330, 1
        %v420 = vpop.permute.xlu0 %419
        %v421 = vsel %vm411, %v418, %v420
        %v422 = vsel %vm411, %v420, %v418
        %v423 = vstv %s406
        %v424 = vmul.f32 %v423, %v422
        %v425 = vmul.f32 %v423, %v421
        %v426 = vadd.f32 %v415, %v424
        %v427 = vadd.f32 %v416, %v425
        %v429 = vlaneseq
        %v430 = vshrl.u32 %v429, 7
        %v431 = vsub.s32 0, %v430
        %v432 = vrot.slane %v293, %v431
        %v433 = vlaneseq
        %v434 = vshrl.u32 %v433, 7
        %v435 = vsub.s32 1, %v434
        %v436 = vrot.slane %v293, %v435
        %v439 = vmul.f32 %v426, %v432
        %v440 = vmul.f32 %v427, %v436
        %v441 = vadd.f32 %v403, %v439
        %v442 = vadd.f32 %v404, %v440
        %s443 = sld [smem:[#allocation6 + $0x3]]
        %s444 = sld [smem:[#allocation6 + $0x34]]
        %v445 = vstv %s443
        %v446 = vmul.f32 %v445, %v327
        %v447 = vmul.f32 %v445, %v328
        %v448 = vstv %s444
        %v449 = vmul.f32 %v448, %v329
        %v450 = vmul.f32 %v448, %v330
        %v451 = vadd.f32 %v446, %v449
        %v452 = vadd.f32 %v447, %v450
        %v453 = vadd.f32 %v441, %v451
        %v454 = vadd.f32 %v442, %v452
        %s455 = sld [smem:[#allocation6 + $0x4]]
        %s456 = sld [smem:[#allocation6 + $0x35]]
        %457 = vrot.lane.b32.xlu0 %v327, 127
        %v458 = vpop.permute.xlu0 %457
        %459 = vrot.lane.b32.xlu0 %v328, 127
        %v460 = vpop.permute.xlu0 %459
        %vm461 = vcmp.lt.s32.totalorder %v305, 127
        %v462 = vsel %vm461, %v458, %v460
        %v463 = vsel %vm461, %v460, %v458
        %v464 = vstv %s455
        %v465 = vmul.f32 %v464, %v462
        %v466 = vmul.f32 %v464, %v463
        %467 = vrot.lane.b32.xlu0 %v329, 127
        %v468 = vpop.permute.xlu0 %467
        %469 = vrot.lane.b32.xlu0 %v330, 127
        %v470 = vpop.permute.xlu0 %469
        %v471 = vsel %vm461, %v468, %v470
        %v472 = vsel %vm461, %v470, %v468
        %v473 = vstv %s456
        %v474 = vmul.f32 %v473, %v471
        %v475 = vmul.f32 %v473, %v472
        %v476 = vadd.f32 %v465, %v474
        %v477 = vadd.f32 %v466, %v475
        %v479 = vlaneseq
        %v480 = vshrl.u32 %v479, 7
        %v481 = vsub.s32 0, %v480
        %v482 = vrot.slane %v295, %v481
        %v483 = vlaneseq
        %v484 = vshrl.u32 %v483, 7
        %v485 = vsub.s32 1, %v484
        %v486 = vrot.slane %v295, %v485
        %v489 = vmul.f32 %v476, %v482
        %v490 = vmul.f32 %v477, %v486
        %v491 = vadd.f32 %v453, %v489
        %v492 = vadd.f32 %v454, %v490
        %s493 = sld [smem:[#allocation6 + $0x5]]
        %s494 = sld [smem:[#allocation6 + $0x36]]
        %495 = vrot.lane.b32.xlu0 %v327, 126
        %v496 = vpop.permute.xlu0 %495
        %497 = vrot.lane.b32.xlu0 %v328, 126
        %v498 = vpop.permute.xlu0 %497
        %vm499 = vcmp.lt.s32.totalorder %v305, 126
        %v500 = vsel %vm499, %v496, %v498
        %v501 = vsel %vm499, %v498, %v496
        %v502 = vstv %s493
        %v503 = vmul.f32 %v502, %v500
        %v504 = vmul.f32 %v502, %v501
        %505 = vrot.lane.b32.xlu0 %v329, 126
        %v506 = vpop.permute.xlu0 %505
        %507 = vrot.lane.b32.xlu0 %v330, 126
        %v508 = vpop.permute.xlu0 %507
        %v509 = vsel %vm499, %v506, %v508
        %v510 = vsel %vm499, %v508, %v506
        %v511 = vstv %s494
        %v512 = vmul.f32 %v511, %v509
        %v513 = vmul.f32 %v511, %v510
        %v514 = vadd.f32 %v503, %v512
        %v515 = vadd.f32 %v504, %v513
        %v517 = vlaneseq
        %v518 = vshrl.u32 %v517, 7
        %v519 = vsub.s32 0, %v518
        %v520 = vrot.slane %v297, %v519
        %v521 = vlaneseq
        %v522 = vshrl.u32 %v521, 7
        %v523 = vsub.s32 1, %v522
        %v524 = vrot.slane %v297, %v523
        %v527 = vmul.f32 %v514, %v520
        %v528 = vmul.f32 %v515, %v524
        %v529 = vadd.f32 %v491, %v527
        %v530 = vadd.f32 %v492, %v528
        %s531 = sld [smem:[#allocation6 + $0x6]]
        %s532 = sld [smem:[#allocation6 + $0x37]]
        %533 = vrot.lane.b32.xlu0 %v327, 125
        %v534 = vpop.permute.xlu0 %533
        %535 = vrot.lane.b32.xlu0 %v328, 125
        %v536 = vpop.permute.xlu0 %535
        %vm537 = vcmp.lt.s32.totalorder %v305, 125
        %v538 = vsel %vm537, %v534, %v536
        %v539 = vsel %vm537, %v536, %v534
        %v540 = vstv %s531
        %v541 = vmul.f32 %v540, %v538
        %v542 = vmul.f32 %v540, %v539
        %543 = vrot.lane.b32.xlu0 %v329, 125
        %v544 = vpop.permute.xlu0 %543
        %545 = vrot.lane.b32.xlu0 %v330, 125
        %v546 = vpop.permute.xlu0 %545
        %v547 = vsel %vm537, %v544, %v546
        %v548 = vsel %vm537, %v546, %v544
        %v549 = vstv %s532
        %v550 = vmul.f32 %v549, %v547
        %v551 = vmul.f32 %v549, %v548
        %v552 = vadd.f32 %v541, %v550
        %v553 = vadd.f32 %v542, %v551
        %v555 = vlaneseq
        %v556 = vshrl.u32 %v555, 7
        %v557 = vsub.s32 0, %v556
        %v558 = vrot.slane %v299, %v557
        %v559 = vlaneseq
        %v560 = vshrl.u32 %v559, 7
        %v561 = vsub.s32 1, %v560
        %v562 = vrot.slane %v299, %v561
        %v565 = vmul.f32 %v552, %v558
        %v566 = vmul.f32 %v553, %v562
        %v567 = vadd.f32 %v529, %v565
        %v568 = vadd.f32 %v530, %v566
        %569 = vrot.lane.b32.xlu0 %v273, 32
        %v570 = vpop.permute.xlu0 %569
        %571 = vrot.lane.b32.xlu0 %v274, 32
        %v572 = vpop.permute.xlu0 %571
        %vm573 = vcmp.lt.s32.totalorder %v305, 32
        %v574 = vsel %vm573, %v570, %v572
        %v575 = vsel %vm573, %v572, %v570
        %576 = vrot.lane.b32.xlu0 %v281, 32
        %v577 = vpop.permute.xlu0 %576
        %578 = vrot.lane.b32.xlu0 %v288, 32
        %v579 = vpop.permute.xlu0 %578
        %v580 = vsel %vm573, %v577, %v579
        %v581 = vsel %vm573, %v579, %v577
        %s582 = scalar_lea.vmem [#allocation7], 1
        %v583 = vld [vmem:[%s582] ss:$8 sm:$0x3]
        %v585 = vlaneseq
        %v586 = vshrl.u32 %v585, 7
        %v587 = vsub.s32 0, %v586
        %v588 = vrot.slane %v583, %v587
        %v589 = vlaneseq
        %v590 = vshrl.u32 %v589, 7
        %v591 = vsub.s32 1, %v590
        %v592 = vrot.slane %v583, %v591
        %v595 = vmul.f32 %v575, %v588
        %v596 = vmul.f32 %v574, %v592
        %v597 = vmul.f32 %v581, %v588
        %v598 = vmul.f32 %v580, %v592
        %s599 = sld [smem:[#allocation6 + $0x7]]
        %s600 = sld [smem:[#allocation6 + $0x38]]
        %601 = vrot.lane.b32.xlu0 %v595, 3
        %v602 = vpop.permute.xlu0 %601
        %603 = vrot.lane.b32.xlu0 %v596, 3
        %v604 = vpop.permute.xlu0 %603
        %v605 = vsel %vm337, %v602, %v604
        %v606 = vsel %vm337, %v604, %v602
        %v607 = vstv %s599
        %v608 = vmul.f32 %v607, %v606
        %v609 = vmul.f32 %v607, %v605
        %610 = vrot.lane.b32.xlu0 %v597, 3
        %v611 = vpop.permute.xlu0 %610
        %612 = vrot.lane.b32.xlu0 %v598, 3
        %v613 = vpop.permute.xlu0 %612
        %v614 = vsel %vm337, %v611, %v613
        %v615 = vsel %vm337, %v613, %v611
        %v616 = vstv %s600
        %v617 = vmul.f32 %v616, %v615
        %v618 = vmul.f32 %v616, %v614
        %v619 = vadd.f32 %v608, %v617
        %v620 = vadd.f32 %v609, %v618
        %v621 = vmul.f32 %v619, %v358
        %v622 = vmul.f32 %v620, %v362
        %s623 = sld [smem:[#allocation6 + $0x8]]
        %s624 = sld [smem:[#allocation6 + $0x39]]
        %625 = vrot.lane.b32.xlu0 %v595, 2
        %v626 = vpop.permute.xlu0 %625
        %627 = vrot.lane.b32.xlu0 %v596, 2
        %v628 = vpop.permute.xlu0 %627
        %v629 = vsel %vm373, %v626, %v628
        %v630 = vsel %vm373, %v628, %v626
        %v631 = vstv %s623
        %v632 = vmul.f32 %v631, %v630
        %v633 = vmul.f32 %v631, %v629
        %634 = vrot.lane.b32.xlu0 %v597, 2
        %v635 = vpop.permute.xlu0 %634
        %636 = vrot.lane.b32.xlu0 %v598, 2
        %v637 = vpop.permute.xlu0 %636
        %v638 = vsel %vm373, %v635, %v637
        %v639 = vsel %vm373, %v637, %v635
        %v640 = vstv %s624
        %v641 = vmul.f32 %v640, %v639
        %v642 = vmul.f32 %v640, %v638
        %v643 = vadd.f32 %v632, %v641
        %v644 = vadd.f32 %v633, %v642
        %v645 = vmul.f32 %v643, %v394
        %v646 = vmul.f32 %v644, %v398
        %v647 = vadd.f32 %v621, %v645
        %v648 = vadd.f32 %v622, %v646
        %s649 = sld [smem:[#allocation6 + $0x9]]
        %s650 = sld [smem:[#allocation6 + $0x3a]]
        %651 = vrot.lane.b32.xlu0 %v595, 1
        %v652 = vpop.permute.xlu0 %651
        %653 = vrot.lane.b32.xlu0 %v596, 1
        %v654 = vpop.permute.xlu0 %653
        %v655 = vsel %vm411, %v652, %v654
        %v656 = vsel %vm411, %v654, %v652
        %v657 = vstv %s649
        %v658 = vmul.f32 %v657, %v656
        %v659 = vmul.f32 %v657, %v655
        %660 = vrot.lane.b32.xlu0 %v597, 1
        %v661 = vpop.permute.xlu0 %660
        %662 = vrot.lane.b32.xlu0 %v598, 1
        %v663 = vpop.permute.xlu0 %662
        %v664 = vsel %vm411, %v661, %v663
        %v665 = vsel %vm411, %v663, %v661
        %v666 = vstv %s650
        %v667 = vmul.f32 %v666, %v665
        %v668 = vmul.f32 %v666, %v664
        %v669 = vadd.f32 %v658, %v667
        %v670 = vadd.f32 %v659, %v668
        %v671 = vmul.f32 %v669, %v432
        %v672 = vmul.f32 %v670, %v436
        %v673 = vadd.f32 %v647, %v671
        %v674 = vadd.f32 %v648, %v672
        %s675 = sld [smem:[#allocation6 + $0xa]]
        %s676 = sld [smem:[#allocation6 + $0x3b]]
        %v677 = vstv %s675
        %v678 = vmul.f32 %v677, %v595
        %v679 = vmul.f32 %v677, %v596
        %v680 = vstv %s676
        %v681 = vmul.f32 %v680, %v597
        %v682 = vmul.f32 %v680, %v598
        %v683 = vadd.f32 %v678, %v681
        %v684 = vadd.f32 %v679, %v682
        %v685 = vadd.f32 %v673, %v683
        %v686 = vadd.f32 %v674, %v684
        %s687 = sld [smem:[#allocation6 + $0xb]]
        %s688 = sld [smem:[#allocation6 + $0x3c]]
        %689 = vrot.lane.b32.xlu0 %v595, 127
        %v690 = vpop.permute.xlu0 %689
        %691 = vrot.lane.b32.xlu0 %v596, 127
        %v692 = vpop.permute.xlu0 %691
        %v693 = vsel %vm461, %v690, %v692
        %v694 = vsel %vm461, %v692, %v690
        %v695 = vstv %s687
        %v696 = vmul.f32 %v695, %v693
        %v697 = vmul.f32 %v695, %v694
        %698 = vrot.lane.b32.xlu0 %v597, 127
        %v699 = vpop.permute.xlu0 %698
        %700 = vrot.lane.b32.xlu0 %v598, 127
        %v701 = vpop.permute.xlu0 %700
        %v702 = vsel %vm461, %v699, %v701
        %v703 = vsel %vm461, %v701, %v699
        %v704 = vstv %s688
        %v705 = vmul.f32 %v704, %v702
        %v706 = vmul.f32 %v704, %v703
        %v707 = vadd.f32 %v696, %v705
        %v708 = vadd.f32 %v697, %v706
        %v709 = vmul.f32 %v707, %v482
        %v710 = vmul.f32 %v708, %v486
        %v711 = vadd.f32 %v685, %v709
        %v712 = vadd.f32 %v686, %v710
        %s713 = sld [smem:[#allocation6 + $0xc]]
        %s714 = sld [smem:[#allocation6 + $0x3d]]
        %715 = vrot.lane.b32.xlu0 %v595, 126
        %v716 = vpop.permute.xlu0 %715
        %717 = vrot.lane.b32.xlu0 %v596, 126
        %v718 = vpop.permute.xlu0 %717
        %v719 = vsel %vm499, %v716, %v718
        %v720 = vsel %vm499, %v718, %v716
        %v721 = vstv %s713
        %v722 = vmul.f32 %v721, %v719
        %v723 = vmul.f32 %v721, %v720
        %724 = vrot.lane.b32.xlu0 %v597, 126
        %v725 = vpop.permute.xlu0 %724
        %726 = vrot.lane.b32.xlu0 %v598, 126
        %v727 = vpop.permute.xlu0 %726
        %v728 = vsel %vm499, %v725, %v727
        %v729 = vsel %vm499, %v727, %v725
        %v730 = vstv %s714
        %v731 = vmul.f32 %v730, %v728
        %v732 = vmul.f32 %v730, %v729
        %v733 = vadd.f32 %v722, %v731
        %v734 = vadd.f32 %v723, %v732
        %v735 = vmul.f32 %v733, %v520
        %v736 = vmul.f32 %v734, %v524
        %v737 = vadd.f32 %v711, %v735
        %v738 = vadd.f32 %v712, %v736
        %s739 = sld [smem:[#allocation6 + $0xd]]
        %s740 = sld [smem:[#allocation6 + $0x3e]]
        %741 = vrot.lane.b32.xlu0 %v595, 125
        %v742 = vpop.permute.xlu0 %741
        %743 = vrot.lane.b32.xlu0 %v596, 125
        %v744 = vpop.permute.xlu0 %743
        %v745 = vsel %vm537, %v742, %v744
        %v746 = vsel %vm537, %v744, %v742
        %v747 = vstv %s739
        %v748 = vmul.f32 %v747, %v745
        %v749 = vmul.f32 %v747, %v746
        %750 = vrot.lane.b32.xlu0 %v597, 125
        %v751 = vpop.permute.xlu0 %750
        %752 = vrot.lane.b32.xlu0 %v598, 125
        %v753 = vpop.permute.xlu0 %752
        %v754 = vsel %vm537, %v751, %v753
        %v755 = vsel %vm537, %v753, %v751
        %v756 = vstv %s740
        %v757 = vmul.f32 %v756, %v754
        %v758 = vmul.f32 %v756, %v755
        %v759 = vadd.f32 %v748, %v757
        %v760 = vadd.f32 %v749, %v758
        %v761 = vmul.f32 %v759, %v558
        %v762 = vmul.f32 %v760, %v562
        %v763 = vadd.f32 %v737, %v761
        %v764 = vadd.f32 %v738, %v762
        %765 = vrot.lane.b32.xlu0 %v273, 16
        %v766 = vpop.permute.xlu0 %765
        %767 = vrot.lane.b32.xlu0 %v274, 16
        %v768 = vpop.permute.xlu0 %767
        %vm769 = vcmp.lt.s32.totalorder %v305, 16
        %v770 = vsel %vm769, %v766, %v768
        %v771 = vsel %vm769, %v768, %v766
        %772 = vrot.lane.b32.xlu0 %v281, 16
        %v773 = vpop.permute.xlu0 %772
        %774 = vrot.lane.b32.xlu0 %v288, 16
        %v775 = vpop.permute.xlu0 %774
        %v776 = vsel %vm769, %v773, %v775
        %v777 = vsel %vm769, %v775, %v773
        %s778 = scalar_lea.vmem [#allocation7], 2
        %v779 = vld [vmem:[%s778] ss:$8 sm:$0x3]
        %v781 = vlaneseq
        %v782 = vshrl.u32 %v781, 7
        %v783 = vsub.s32 0, %v782
        %v784 = vrot.slane %v779, %v783
        %v785 = vlaneseq
        %v786 = vshrl.u32 %v785, 7
        %v787 = vsub.s32 1, %v786
        %v788 = vrot.slane %v779, %v787
        %v791 = vmul.f32 %v771, %v784
        %v792 = vmul.f32 %v770, %v788
        %v793 = vmul.f32 %v777, %v784
        %v794 = vmul.f32 %v776, %v788
        %s795 = sld [smem:[#allocation6 + $0xe]]
        %s796 = sld [smem:[#allocation6 + $0x3f]]
        %797 = vrot.lane.b32.xlu0 %v791, 3
        %v798 = vpop.permute.xlu0 %797
        %799 = vrot.lane.b32.xlu0 %v792, 3
        %v800 = vpop.permute.xlu0 %799
        %v801 = vsel %vm337, %v798, %v800
        %v802 = vsel %vm337, %v800, %v798
        %v803 = vstv %s795
        %v804 = vmul.f32 %v803, %v802
        %v805 = vmul.f32 %v803, %v801
        %806 = vrot.lane.b32.xlu0 %v793, 3
        %v807 = vpop.permute.xlu0 %806
        %808 = vrot.lane.b32.xlu0 %v794, 3
        %v809 = vpop.permute.xlu0 %808
        %v810 = vsel %vm337, %v807, %v809
        %v811 = vsel %vm337, %v809, %v807
        %v812 = vstv %s796
        %v813 = vmul.f32 %v812, %v811
        %v814 = vmul.f32 %v812, %v810
        %v815 = vadd.f32 %v804, %v813
        %v816 = vadd.f32 %v805, %v814
        %v817 = vmul.f32 %v815, %v358
        %v818 = vmul.f32 %v816, %v362
        %s819 = sld [smem:[#allocation6 + $0xf]]
        %s820 = sld [smem:[#allocation6 + $0x40]]
        %821 = vrot.lane.b32.xlu0 %v791, 2
        %v822 = vpop.permute.xlu0 %821
        %823 = vrot.lane.b32.xlu0 %v792, 2
        %v824 = vpop.permute.xlu0 %823
        %v825 = vsel %vm373, %v822, %v824
        %v826 = vsel %vm373, %v824, %v822
        %v827 = vstv %s819
        %v828 = vmul.f32 %v827, %v826
        %v829 = vmul.f32 %v827, %v825
        %830 = vrot.lane.b32.xlu0 %v793, 2
        %v831 = vpop.permute.xlu0 %830
        %832 = vrot.lane.b32.xlu0 %v794, 2
        %v833 = vpop.permute.xlu0 %832
        %v834 = vsel %vm373, %v831, %v833
        %v835 = vsel %vm373, %v833, %v831
        %v836 = vstv %s820
        %v837 = vmul.f32 %v836, %v835
        %v838 = vmul.f32 %v836, %v834
        %v839 = vadd.f32 %v828, %v837
        %v840 = vadd.f32 %v829, %v838
        %v841 = vmul.f32 %v839, %v394
        %v842 = vmul.f32 %v840, %v398
        %v843 = vadd.f32 %v817, %v841
        %v844 = vadd.f32 %v818, %v842
        %s845 = sld [smem:[#allocation6 + $0x10]]
        %s846 = sld [smem:[#allocation6 + $0x41]]
        %847 = vrot.lane.b32.xlu0 %v791, 1
        %v848 = vpop.permute.xlu0 %847
        %849 = vrot.lane.b32.xlu0 %v792, 1
        %v850 = vpop.permute.xlu0 %849
        %v851 = vsel %vm411, %v848, %v850
        %v852 = vsel %vm411, %v850, %v848
        %v853 = vstv %s845
        %v854 = vmul.f32 %v853, %v852
        %v855 = vmul.f32 %v853, %v851
        %856 = vrot.lane.b32.xlu0 %v793, 1
        %v857 = vpop.permute.xlu0 %856
        %858 = vrot.lane.b32.xlu0 %v794, 1
        %v859 = vpop.permute.xlu0 %858
        %v860 = vsel %vm411, %v857, %v859
        %v861 = vsel %vm411, %v859, %v857
        %v862 = vstv %s846
        %v863 = vmul.f32 %v862, %v861
        %v864 = vmul.f32 %v862, %v860
        %v865 = vadd.f32 %v854, %v863
        %v866 = vadd.f32 %v855, %v864
        %v867 = vmul.f32 %v865, %v432
        %v868 = vmul.f32 %v866, %v436
        %v869 = vadd.f32 %v843, %v867
        %v870 = vadd.f32 %v844, %v868
        %s871 = sld [smem:[#allocation6 + $0x11]]
        %s872 = sld [smem:[#allocation6 + $0x42]]
        %v873 = vstv %s871
        %v874 = vmul.f32 %v873, %v791
        %v875 = vmul.f32 %v873, %v792
        %v876 = vstv %s872
        %v877 = vmul.f32 %v876, %v793
        %v878 = vmul.f32 %v876, %v794
        %v879 = vadd.f32 %v874, %v877
        %v880 = vadd.f32 %v875, %v878
        %v881 = vadd.f32 %v869, %v879
        %v882 = vadd.f32 %v870, %v880
        %s883 = sld [smem:[#allocation6 + $0x12]]
        %s884 = sld [smem:[#allocation6 + $0x43]]
        %885 = vrot.lane.b32.xlu0 %v791, 127
        %v886 = vpop.permute.xlu0 %885
        %887 = vrot.lane.b32.xlu0 %v792, 127
        %v888 = vpop.permute.xlu0 %887
        %v889 = vsel %vm461, %v886, %v888
        %v890 = vsel %vm461, %v888, %v886
        %v891 = vstv %s883
        %v892 = vmul.f32 %v891, %v889
        %v893 = vmul.f32 %v891, %v890
        %894 = vrot.lane.b32.xlu0 %v793, 127
        %v895 = vpop.permute.xlu0 %894
        %896 = vrot.lane.b32.xlu0 %v794, 127
        %v897 = vpop.permute.xlu0 %896
        %v898 = vsel %vm461, %v895, %v897
        %v899 = vsel %vm461, %v897, %v895
        %v900 = vstv %s884
        %v901 = vmul.f32 %v900, %v898
        %v902 = vmul.f32 %v900, %v899
        %v903 = vadd.f32 %v892, %v901
        %v904 = vadd.f32 %v893, %v902
        %v905 = vmul.f32 %v903, %v482
        %v906 = vmul.f32 %v904, %v486
        %v907 = vadd.f32 %v881, %v905
        %v908 = vadd.f32 %v882, %v906
        %s909 = sld [smem:[#allocation6 + $0x13]]
        %s910 = sld [smem:[#allocation6 + $0x44]]
        %911 = vrot.lane.b32.xlu0 %v791, 126
        %v912 = vpop.permute.xlu0 %911
        %913 = vrot.lane.b32.xlu0 %v792, 126
        %v914 = vpop.permute.xlu0 %913
        %v915 = vsel %vm499, %v912, %v914
        %v916 = vsel %vm499, %v914, %v912
        %v917 = vstv %s909
        %v918 = vmul.f32 %v917, %v915
        %v919 = vmul.f32 %v917, %v916
        %920 = vrot.lane.b32.xlu0 %v793, 126
        %v921 = vpop.permute.xlu0 %920
        %922 = vrot.lane.b32.xlu0 %v794, 126
        %v923 = vpop.permute.xlu0 %922
        %v924 = vsel %vm499, %v921, %v923
        %v925 = vsel %vm499, %v923, %v921
        %v926 = vstv %s910
        %v927 = vmul.f32 %v926, %v924
        %v928 = vmul.f32 %v926, %v925
        %v929 = vadd.f32 %v918, %v927
        %v930 = vadd.f32 %v919, %v928
        %v931 = vmul.f32 %v929, %v520
        %v932 = vmul.f32 %v930, %v524
        %v933 = vadd.f32 %v907, %v931
        %v934 = vadd.f32 %v908, %v932
        %s935 = sld [smem:[#allocation6 + $0x14]]
        %s936 = sld [smem:[#allocation6 + $0x45]]
        %937 = vrot.lane.b32.xlu0 %v791, 125
        %v938 = vpop.permute.xlu0 %937
        %939 = vrot.lane.b32.xlu0 %v792, 125
        %v940 = vpop.permute.xlu0 %939
        %v941 = vsel %vm537, %v938, %v940
        %v942 = vsel %vm537, %v940, %v938
        %v943 = vstv %s935
        %v944 = vmul.f32 %v943, %v941
        %v945 = vmul.f32 %v943, %v942
        %946 = vrot.lane.b32.xlu0 %v793, 125
        %v947 = vpop.permute.xlu0 %946
        %948 = vrot.lane.b32.xlu0 %v794, 125
        %v949 = vpop.permute.xlu0 %948
        %v950 = vsel %vm537, %v947, %v949
        %v951 = vsel %vm537, %v949, %v947
        %v952 = vstv %s936
        %v953 = vmul.f32 %v952, %v950
        %v954 = vmul.f32 %v952, %v951
        %v955 = vadd.f32 %v944, %v953
        %v956 = vadd.f32 %v945, %v954
        %v957 = vmul.f32 %v955, %v558
        %v958 = vmul.f32 %v956, %v562
        %v959 = vadd.f32 %v933, %v957
        %v960 = vadd.f32 %v934, %v958
        %s961 = sld [smem:[#allocation6 + $0x15]]
        %s962 = sld [smem:[#allocation6 + $0x46]]
        %963 = vrot.lane.b32.xlu0 %v273, 3
        %v964 = vpop.permute.xlu0 %963
        %965 = vrot.lane.b32.xlu0 %v274, 3
        %v966 = vpop.permute.xlu0 %965
        %v967 = vsel %vm337, %v964, %v966
        %v968 = vsel %vm337, %v966, %v964
        %v969 = vstv %s961
        %v970 = vmul.f32 %v969, %v968
        %v971 = vmul.f32 %v969, %v967
        %972 = vrot.lane.b32.xlu0 %v281, 3
        %v973 = vpop.permute.xlu0 %972
        %974 = vrot.lane.b32.xlu0 %v288, 3
        %v975 = vpop.permute.xlu0 %974
        %v976 = vsel %vm337, %v973, %v975
        %v977 = vsel %vm337, %v975, %v973
        %v978 = vstv %s962
        %v979 = vmul.f32 %v978, %v977
        %v980 = vmul.f32 %v978, %v976
        %v981 = vadd.f32 %v970, %v979
        %v982 = vadd.f32 %v971, %v980
        %v983 = vmul.f32 %v981, %v358
        %v984 = vmul.f32 %v982, %v362
        %s985 = sld [smem:[#allocation6 + $0x16]]
        %s986 = sld [smem:[#allocation6 + $0x47]]
        %987 = vrot.lane.b32.xlu0 %v273, 2
        %v988 = vpop.permute.xlu0 %987
        %989 = vrot.lane.b32.xlu0 %v274, 2
        %v990 = vpop.permute.xlu0 %989
        %v991 = vsel %vm373, %v988, %v990
        %v992 = vsel %vm373, %v990, %v988
        %v993 = vstv %s985
        %v994 = vmul.f32 %v993, %v992
        %v995 = vmul.f32 %v993, %v991
        %996 = vrot.lane.b32.xlu0 %v281, 2
        %v997 = vpop.permute.xlu0 %996
        %998 = vrot.lane.b32.xlu0 %v288, 2
        %v999 = vpop.permute.xlu0 %998
        %v1000 = vsel %vm373, %v997, %v999
        %v1001 = vsel %vm373, %v999, %v997
        %v1002 = vstv %s986
        %v1003 = vmul.f32 %v1002, %v1001
        %v1004 = vmul.f32 %v1002, %v1000
        %v1005 = vadd.f32 %v994, %v1003
        %v1006 = vadd.f32 %v995, %v1004
        %v1007 = vmul.f32 %v1005, %v394
        %v1008 = vmul.f32 %v1006, %v398
        %v1009 = vadd.f32 %v983, %v1007
        %v1010 = vadd.f32 %v984, %v1008
        %s1011 = sld [smem:[#allocation6 + $0x17]]
        %s1012 = sld [smem:[#allocation6 + $0x48]]
        %1013 = vrot.lane.b32.xlu0 %v273, 1
        %v1014 = vpop.permute.xlu0 %1013
        %1015 = vrot.lane.b32.xlu0 %v274, 1
        %v1016 = vpop.permute.xlu0 %1015
        %v1017 = vsel %vm411, %v1014, %v1016
        %v1018 = vsel %vm411, %v1016, %v1014
        %v1019 = vstv %s1011
        %v1020 = vmul.f32 %v1019, %v1018
        %v1021 = vmul.f32 %v1019, %v1017
        %1022 = vrot.lane.b32.xlu0 %v281, 1
        %v1023 = vpop.permute.xlu0 %1022
        %1024 = vrot.lane.b32.xlu0 %v288, 1
        %v1025 = vpop.permute.xlu0 %1024
        %v1026 = vsel %vm411, %v1023, %v1025
        %v1027 = vsel %vm411, %v1025, %v1023
        %v1028 = vstv %s1012
        %v1029 = vmul.f32 %v1028, %v1027
        %v1030 = vmul.f32 %v1028, %v1026
        %v1031 = vadd.f32 %v1020, %v1029
        %v1032 = vadd.f32 %v1021, %v1030
        %v1033 = vmul.f32 %v1031, %v432
        %v1034 = vmul.f32 %v1032, %v436
        %v1035 = vadd.f32 %v1009, %v1033
        %v1036 = vadd.f32 %v1010, %v1034
        %s1037 = sld [smem:[#allocation6 + $0x18]]
        %s1038 = sld [smem:[#allocation6 + $0x49]]
        %v1039 = vstv %s1037
        %v1040 = vmul.f32 %v1039, %v273
        %v1041 = vmul.f32 %v1039, %v274
        %v1042 = vstv %s1038
        %v1043 = vmul.f32 %v1042, %v281
        %v1044 = vmul.f32 %v1042, %v288
        %v1045 = vadd.f32 %v1040, %v1043
        %v1046 = vadd.f32 %v1041, %v1044
        %v1047 = vadd.f32 %v1035, %v1045
        %v1048 = vadd.f32 %v1036, %v1046
        %s1049 = sld [smem:[#allocation6 + $0x19]]
        %s1050 = sld [smem:[#allocation6 + $0x4a]]
        %1051 = vrot.lane.b32.xlu0 %v273, 127
        %v1052 = vpop.permute.xlu0 %1051
        %1053 = vrot.lane.b32.xlu0 %v274, 127
        %v1054 = vpop.permute.xlu0 %1053
        %v1055 = vsel %vm461, %v1052, %v1054
        %v1056 = vsel %vm461, %v1054, %v1052
        %v1057 = vstv %s1049
        %v1058 = vmul.f32 %v1057, %v1055
        %v1059 = vmul.f32 %v1057, %v1056
        %1060 = vrot.lane.b32.xlu0 %v281, 127
        %v1061 = vpop.permute.xlu0 %1060
        %1062 = vrot.lane.b32.xlu0 %v288, 127
        %v1063 = vpop.permute.xlu0 %1062
        %v1064 = vsel %vm461, %v1061, %v1063
        %v1065 = vsel %vm461, %v1063, %v1061
        %v1066 = vstv %s1050
        %v1067 = vmul.f32 %v1066, %v1064
        %v1068 = vmul.f32 %v1066, %v1065
        %v1069 = vadd.f32 %v1058, %v1067
        %v1070 = vadd.f32 %v1059, %v1068
        %v1071 = vmul.f32 %v1069, %v482
        %v1072 = vmul.f32 %v1070, %v486
        %v1073 = vadd.f32 %v1047, %v1071
        %v1074 = vadd.f32 %v1048, %v1072
        %s1075 = sld [smem:[#allocation6 + $0x1a]]
        %s1076 = sld [smem:[#allocation6 + $0x4b]]
        %1077 = vrot.lane.b32.xlu0 %v273, 126
        %v1078 = vpop.permute.xlu0 %1077
        %1079 = vrot.lane.b32.xlu0 %v274, 126
        %v1080 = vpop.permute.xlu0 %1079
        %v1081 = vsel %vm499, %v1078, %v1080
        %v1082 = vsel %vm499, %v1080, %v1078
        %v1083 = vstv %s1075
        %v1084 = vmul.f32 %v1083, %v1081
        %v1085 = vmul.f32 %v1083, %v1082
        %1086 = vrot.lane.b32.xlu0 %v281, 126
        %v1087 = vpop.permute.xlu0 %1086
        %1088 = vrot.lane.b32.xlu0 %v288, 126
        %v1089 = vpop.permute.xlu0 %1088
        %v1090 = vsel %vm499, %v1087, %v1089
        %v1091 = vsel %vm499, %v1089, %v1087
        %v1092 = vstv %s1076
        %v1093 = vmul.f32 %v1092, %v1090
        %v1094 = vmul.f32 %v1092, %v1091
        %v1095 = vadd.f32 %v1084, %v1093
        %v1096 = vadd.f32 %v1085, %v1094
        %v1097 = vmul.f32 %v1095, %v520
        %v1098 = vmul.f32 %v1096, %v524
        %v1099 = vadd.f32 %v1073, %v1097
        %v1100 = vadd.f32 %v1074, %v1098
        %s1101 = sld [smem:[#allocation6 + $0x1b]]
        %s1102 = sld [smem:[#allocation6 + $0x4c]]
        %1103 = vrot.lane.b32.xlu0 %v273, 125
        %v1104 = vpop.permute.xlu0 %1103
        %1105 = vrot.lane.b32.xlu0 %v274, 125
        %v1106 = vpop.permute.xlu0 %1105
        %v1107 = vsel %vm537, %v1104, %v1106
        %v1108 = vsel %vm537, %v1106, %v1104
        %v1109 = vstv %s1101
        %v1110 = vmul.f32 %v1109, %v1107
        %v1111 = vmul.f32 %v1109, %v1108
        %1112 = vrot.lane.b32.xlu0 %v281, 125
        %v1113 = vpop.permute.xlu0 %1112
        %1114 = vrot.lane.b32.xlu0 %v288, 125
        %v1115 = vpop.permute.xlu0 %1114
        %v1116 = vsel %vm537, %v1113, %v1115
        %v1117 = vsel %vm537, %v1115, %v1113
        %v1118 = vstv %s1102
        %v1119 = vmul.f32 %v1118, %v1116
        %v1120 = vmul.f32 %v1118, %v1117
        %v1121 = vadd.f32 %v1110, %v1119
        %v1122 = vadd.f32 %v1111, %v1120
        %v1123 = vmul.f32 %v1121, %v558
        %v1124 = vmul.f32 %v1122, %v562
        %v1125 = vadd.f32 %v1099, %v1123
        %v1126 = vadd.f32 %v1100, %v1124
        %1127 = vrot.lane.b32.xlu0 %v273, 112
        %v1128 = vpop.permute.xlu0 %1127
        %1129 = vrot.lane.b32.xlu0 %v274, 112
        %v1130 = vpop.permute.xlu0 %1129
        %vm1131 = vcmp.lt.s32.totalorder %v305, 112
        %v1132 = vsel %vm1131, %v1128, %v1130
        %v1133 = vsel %vm1131, %v1130, %v1128
        %1134 = vrot.lane.b32.xlu0 %v281, 112
        %v1135 = vpop.permute.xlu0 %1134
        %1136 = vrot.lane.b32.xlu0 %v288, 112
        %v1137 = vpop.permute.xlu0 %1136
        %v1138 = vsel %vm1131, %v1135, %v1137
        %v1139 = vsel %vm1131, %v1137, %v1135
        %s1140 = scalar_lea.vmem [#allocation7], 4
        %v1141 = vld [vmem:[%s1140] ss:$8 sm:$0x3]
        %v1143 = vlaneseq
        %v1144 = vshrl.u32 %v1143, 7
        %v1145 = vsub.s32 0, %v1144
        %v1146 = vrot.slane %v1141, %v1145
        %v1147 = vlaneseq
        %v1148 = vshrl.u32 %v1147, 7
        %v1149 = vsub.s32 1, %v1148
        %v1150 = vrot.slane %v1141, %v1149
        %v1153 = vmul.f32 %v1132, %v1146
        %v1154 = vmul.f32 %v1133, %v1150
        %v1155 = vmul.f32 %v1138, %v1146
        %v1156 = vmul.f32 %v1139, %v1150
        %s1157 = sld [smem:[#allocation6 + $0x1c]]
        %s1158 = sld [smem:[#allocation6 + $0x4d]]
        %1159 = vrot.lane.b32.xlu0 %v1153, 3
        %v1160 = vpop.permute.xlu0 %1159
        %1161 = vrot.lane.b32.xlu0 %v1154, 3
        %v1162 = vpop.permute.xlu0 %1161
        %v1163 = vsel %vm337, %v1160, %v1162
        %v1164 = vsel %vm337, %v1162, %v1160
        %v1165 = vstv %s1157
        %v1166 = vmul.f32 %v1165, %v1164
        %v1167 = vmul.f32 %v1165, %v1163
        %1168 = vrot.lane.b32.xlu0 %v1155, 3
        %v1169 = vpop.permute.xlu0 %1168
        %1170 = vrot.lane.b32.xlu0 %v1156, 3
        %v1171 = vpop.permute.xlu0 %1170
        %v1172 = vsel %vm337, %v1169, %v1171
        %v1173 = vsel %vm337, %v1171, %v1169
        %v1174 = vstv %s1158
        %v1175 = vmul.f32 %v1174, %v1173
        %v1176 = vmul.f32 %v1174, %v1172
        %v1177 = vadd.f32 %v1166, %v1175
        %v1178 = vadd.f32 %v1167, %v1176
        %v1179 = vmul.f32 %v1177, %v358
        %v1180 = vmul.f32 %v1178, %v362
        %s1181 = sld [smem:[#allocation6 + $0x1d]]
        %s1182 = sld [smem:[#allocation6 + $0x4e]]
        %1183 = vrot.lane.b32.xlu0 %v1153, 2
        %v1184 = vpop.permute.xlu0 %1183
        %1185 = vrot.lane.b32.xlu0 %v1154, 2
        %v1186 = vpop.permute.xlu0 %1185
        %v1187 = vsel %vm373, %v1184, %v1186
        %v1188 = vsel %vm373, %v1186, %v1184
        %v1189 = vstv %s1181
        %v1190 = vmul.f32 %v1189, %v1188
        %v1191 = vmul.f32 %v1189, %v1187
        %1192 = vrot.lane.b32.xlu0 %v1155, 2
        %v1193 = vpop.permute.xlu0 %1192
        %1194 = vrot.lane.b32.xlu0 %v1156, 2
        %v1195 = vpop.permute.xlu0 %1194
        %v1196 = vsel %vm373, %v1193, %v1195
        %v1197 = vsel %vm373, %v1195, %v1193
        %v1198 = vstv %s1182
        %v1199 = vmul.f32 %v1198, %v1197
        %v1200 = vmul.f32 %v1198, %v1196
        %v1201 = vadd.f32 %v1190, %v1199
        %v1202 = vadd.f32 %v1191, %v1200
        %v1203 = vmul.f32 %v1201, %v394
        %v1204 = vmul.f32 %v1202, %v398
        %v1205 = vadd.f32 %v1179, %v1203
        %v1206 = vadd.f32 %v1180, %v1204
        %s1207 = sld [smem:[#allocation6 + $0x1e]]
        %s1208 = sld [smem:[#allocation6 + $0x4f]]
        %1209 = vrot.lane.b32.xlu0 %v1153, 1
        %v1210 = vpop.permute.xlu0 %1209
        %1211 = vrot.lane.b32.xlu0 %v1154, 1
        %v1212 = vpop.permute.xlu0 %1211
        %v1213 = vsel %vm411, %v1210, %v1212
        %v1214 = vsel %vm411, %v1212, %v1210
        %v1215 = vstv %s1207
        %v1216 = vmul.f32 %v1215, %v1214
        %v1217 = vmul.f32 %v1215, %v1213
        %1218 = vrot.lane.b32.xlu0 %v1155, 1
        %v1219 = vpop.permute.xlu0 %1218
        %1220 = vrot.lane.b32.xlu0 %v1156, 1
        %v1221 = vpop.permute.xlu0 %1220
        %v1222 = vsel %vm411, %v1219, %v1221
        %v1223 = vsel %vm411, %v1221, %v1219
        %v1224 = vstv %s1208
        %v1225 = vmul.f32 %v1224, %v1223
        %v1226 = vmul.f32 %v1224, %v1222
        %v1227 = vadd.f32 %v1216, %v1225
        %v1228 = vadd.f32 %v1217, %v1226
        %v1229 = vmul.f32 %v1227, %v432
        %v1230 = vmul.f32 %v1228, %v436
        %v1231 = vadd.f32 %v1205, %v1229
        %v1232 = vadd.f32 %v1206, %v1230
        %s1233 = sld [smem:[#allocation6 + $0x1f]]
        %s1234 = sld [smem:[#allocation6 + $0x50]]
        %v1235 = vstv %s1233
        %v1236 = vmul.f32 %v1235, %v1153
        %v1237 = vmul.f32 %v1235, %v1154
        %v1238 = vstv %s1234
        %v1239 = vmul.f32 %v1238, %v1155
        %v1240 = vmul.f32 %v1238, %v1156
        %v1241 = vadd.f32 %v1236, %v1239
        %v1242 = vadd.f32 %v1237, %v1240
        %v1243 = vadd.f32 %v1231, %v1241
        %v1244 = vadd.f32 %v1232, %v1242
        %s1245 = sld [smem:[#allocation6 + $0x20]]
        %s1246 = sld [smem:[#allocation6 + $0x51]]
        %1247 = vrot.lane.b32.xlu0 %v1153, 127
        %v1248 = vpop.permute.xlu0 %1247
        %1249 = vrot.lane.b32.xlu0 %v1154, 127
        %v1250 = vpop.permute.xlu0 %1249
        %v1251 = vsel %vm461, %v1248, %v1250
        %v1252 = vsel %vm461, %v1250, %v1248
        %v1253 = vstv %s1245
        %v1254 = vmul.f32 %v1253, %v1251
        %v1255 = vmul.f32 %v1253, %v1252
        %1256 = vrot.lane.b32.xlu0 %v1155, 127
        %v1257 = vpop.permute.xlu0 %1256
        %1258 = vrot.lane.b32.xlu0 %v1156, 127
        %v1259 = vpop.permute.xlu0 %1258
        %v1260 = vsel %vm461, %v1257, %v1259
        %v1261 = vsel %vm461, %v1259, %v1257
        %v1262 = vstv %s1246
        %v1263 = vmul.f32 %v1262, %v1260
        %v1264 = vmul.f32 %v1262, %v1261
        %v1265 = vadd.f32 %v1254, %v1263
        %v1266 = vadd.f32 %v1255, %v1264
        %v1267 = vmul.f32 %v1265, %v482
        %v1268 = vmul.f32 %v1266, %v486
        %v1269 = vadd.f32 %v1243, %v1267
        %v1270 = vadd.f32 %v1244, %v1268
        %s1271 = sld [smem:[#allocation6 + $0x21]]
        %s1272 = sld [smem:[#allocation6 + $0x52]]
        %1273 = vrot.lane.b32.xlu0 %v1153, 126
        %v1274 = vpop.permute.xlu0 %1273
        %1275 = vrot.lane.b32.xlu0 %v1154, 126
        %v1276 = vpop.permute.xlu0 %1275
        %v1277 = vsel %vm499, %v1274, %v1276
        %v1278 = vsel %vm499, %v1276, %v1274
        %v1279 = vstv %s1271
        %v1280 = vmul.f32 %v1279, %v1277
        %v1281 = vmul.f32 %v1279, %v1278
        %1282 = vrot.lane.b32.xlu0 %v1155, 126
        %v1283 = vpop.permute.xlu0 %1282
        %1284 = vrot.lane.b32.xlu0 %v1156, 126
        %v1285 = vpop.permute.xlu0 %1284
        %v1286 = vsel %vm499, %v1283, %v1285
        %v1287 = vsel %vm499, %v1285, %v1283
        %v1288 = vstv %s1272
        %v1289 = vmul.f32 %v1288, %v1286
        %v1290 = vmul.f32 %v1288, %v1287
        %v1291 = vadd.f32 %v1280, %v1289
        %v1292 = vadd.f32 %v1281, %v1290
        %v1293 = vmul.f32 %v1291, %v520
        %v1294 = vmul.f32 %v1292, %v524
        %v1295 = vadd.f32 %v1269, %v1293
        %v1296 = vadd.f32 %v1270, %v1294
        %s1297 = sld [smem:[#allocation6 + $0x22]]
        %s1298 = sld [smem:[#allocation6 + $0x53]]
        %1299 = vrot.lane.b32.xlu0 %v1153, 125
        %v1300 = vpop.permute.xlu0 %1299
        %1301 = vrot.lane.b32.xlu0 %v1154, 125
        %v1302 = vpop.permute.xlu0 %1301
        %v1303 = vsel %vm537, %v1300, %v1302
        %v1304 = vsel %vm537, %v1302, %v1300
        %v1305 = vstv %s1297
        %v1306 = vmul.f32 %v1305, %v1303
        %v1307 = vmul.f32 %v1305, %v1304
        %1308 = vrot.lane.b32.xlu0 %v1155, 125
        %v1309 = vpop.permute.xlu0 %1308
        %1310 = vrot.lane.b32.xlu0 %v1156, 125
        %v1311 = vpop.permute.xlu0 %1310
        %v1312 = vsel %vm537, %v1309, %v1311
        %v1313 = vsel %vm537, %v1311, %v1309
        %v1314 = vstv %s1298
        %v1315 = vmul.f32 %v1314, %v1312
        %v1316 = vmul.f32 %v1314, %v1313
        %v1317 = vadd.f32 %v1306, %v1315
        %v1318 = vadd.f32 %v1307, %v1316
        %v1319 = vmul.f32 %v1317, %v558
        %v1320 = vmul.f32 %v1318, %v562
        %v1321 = vadd.f32 %v1295, %v1319
        %v1322 = vadd.f32 %v1296, %v1320
        %1323 = vrot.lane.b32.xlu0 %v273, 96
        %v1324 = vpop.permute.xlu0 %1323
        %1325 = vrot.lane.b32.xlu0 %v274, 96
        %v1326 = vpop.permute.xlu0 %1325
        %vm1327 = vcmp.lt.s32.totalorder %v305, 96
        %v1328 = vsel %vm1327, %v1324, %v1326
        %v1329 = vsel %vm1327, %v1326, %v1324
        %1330 = vrot.lane.b32.xlu0 %v281, 96
        %v1331 = vpop.permute.xlu0 %1330
        %1332 = vrot.lane.b32.xlu0 %v288, 96
        %v1333 = vpop.permute.xlu0 %1332
        %v1334 = vsel %vm1327, %v1331, %v1333
        %v1335 = vsel %vm1327, %v1333, %v1331
        %s1336 = scalar_lea.vmem [#allocation7], 5
        %v1337 = vld [vmem:[%s1336] ss:$8 sm:$0x3]
        %v1339 = vlaneseq
        %v1340 = vshrl.u32 %v1339, 7
        %v1341 = vsub.s32 0, %v1340
        %v1342 = vrot.slane %v1337, %v1341
        %v1343 = vlaneseq
        %v1344 = vshrl.u32 %v1343, 7
        %v1345 = vsub.s32 1, %v1344
        %v1346 = vrot.slane %v1337, %v1345
        %v1349 = vmul.f32 %v1328, %v1342
        %v1350 = vmul.f32 %v1329, %v1346
        %v1351 = vmul.f32 %v1334, %v1342
        %v1352 = vmul.f32 %v1335, %v1346
        %s1353 = sld [smem:[#allocation6 + $0x23]]
        %s1354 = sld [smem:[#allocation6 + $0x54]]
        %1355 = vrot.lane.b32.xlu0 %v1349, 3
        %v1356 = vpop.permute.xlu0 %1355
        %1357 = vrot.lane.b32.xlu0 %v1350, 3
        %v1358 = vpop.permute.xlu0 %1357
        %v1359 = vsel %vm337, %v1356, %v1358
        %v1360 = vsel %vm337, %v1358, %v1356
        %v1361 = vstv %s1353
        %v1362 = vmul.f32 %v1361, %v1360
        %v1363 = vmul.f32 %v1361, %v1359
        %1364 = vrot.lane.b32.xlu0 %v1351, 3
        %v1365 = vpop.permute.xlu0 %1364
        %1366 = vrot.lane.b32.xlu0 %v1352, 3
        %v1367 = vpop.permute.xlu0 %1366
        %v1368 = vsel %vm337, %v1365, %v1367
        %v1369 = vsel %vm337, %v1367, %v1365
        %v1370 = vstv %s1354
        %v1371 = vmul.f32 %v1370, %v1369
        %v1372 = vmul.f32 %v1370, %v1368
        %v1373 = vadd.f32 %v1362, %v1371
        %v1374 = vadd.f32 %v1363, %v1372
        %v1375 = vmul.f32 %v1373, %v358
        %v1376 = vmul.f32 %v1374, %v362
        %s1377 = sld [smem:[#allocation6 + $0x24]]
        %s1378 = sld [smem:[#allocation6 + $0x55]]
        %1379 = vrot.lane.b32.xlu0 %v1349, 2
        %v1380 = vpop.permute.xlu0 %1379
        %1381 = vrot.lane.b32.xlu0 %v1350, 2
        %v1382 = vpop.permute.xlu0 %1381
        %v1383 = vsel %vm373, %v1380, %v1382
        %v1384 = vsel %vm373, %v1382, %v1380
        %v1385 = vstv %s1377
        %v1386 = vmul.f32 %v1385, %v1384
        %v1387 = vmul.f32 %v1385, %v1383
        %1388 = vrot.lane.b32.xlu0 %v1351, 2
        %v1389 = vpop.permute.xlu0 %1388
        %1390 = vrot.lane.b32.xlu0 %v1352, 2
        %v1391 = vpop.permute.xlu0 %1390
        %v1392 = vsel %vm373, %v1389, %v1391
        %v1393 = vsel %vm373, %v1391, %v1389
        %v1394 = vstv %s1378
        %v1395 = vmul.f32 %v1394, %v1393
        %v1396 = vmul.f32 %v1394, %v1392
        %v1397 = vadd.f32 %v1386, %v1395
        %v1398 = vadd.f32 %v1387, %v1396
        %v1399 = vmul.f32 %v1397, %v394
        %v1400 = vmul.f32 %v1398, %v398
        %v1401 = vadd.f32 %v1375, %v1399
        %v1402 = vadd.f32 %v1376, %v1400
        %s1403 = sld [smem:[#allocation6 + $0x25]]
        %s1404 = sld [smem:[#allocation6 + $0x56]]
        %1405 = vrot.lane.b32.xlu0 %v1349, 1
        %v1406 = vpop.permute.xlu0 %1405
        %1407 = vrot.lane.b32.xlu0 %v1350, 1
        %v1408 = vpop.permute.xlu0 %1407
        %v1409 = vsel %vm411, %v1406, %v1408
        %v1410 = vsel %vm411, %v1408, %v1406
        %v1411 = vstv %s1403
        %v1412 = vmul.f32 %v1411, %v1410
        %v1413 = vmul.f32 %v1411, %v1409
        %1414 = vrot.lane.b32.xlu0 %v1351, 1
        %v1415 = vpop.permute.xlu0 %1414
        %1416 = vrot.lane.b32.xlu0 %v1352, 1
        %v1417 = vpop.permute.xlu0 %1416
        %v1418 = vsel %vm411, %v1415, %v1417
        %v1419 = vsel %vm411, %v1417, %v1415
        %v1420 = vstv %s1404
        %v1421 = vmul.f32 %v1420, %v1419
        %v1422 = vmul.f32 %v1420, %v1418
        %v1423 = vadd.f32 %v1412, %v1421
        %v1424 = vadd.f32 %v1413, %v1422
        %v1425 = vmul.f32 %v1423, %v432
        %v1426 = vmul.f32 %v1424, %v436
        %v1427 = vadd.f32 %v1401, %v1425
        %v1428 = vadd.f32 %v1402, %v1426
        %s1429 = sld [smem:[#allocation6 + $0x26]]
        %s1430 = sld [smem:[#allocation6 + $0x57]]
        %v1431 = vstv %s1429
        %v1432 = vmul.f32 %v1431, %v1349
        %v1433 = vmul.f32 %v1431, %v1350
        %v1434 = vstv %s1430
        %v1435 = vmul.f32 %v1434, %v1351
        %v1436 = vmul.f32 %v1434, %v1352
        %v1437 = vadd.f32 %v1432, %v1435
        %v1438 = vadd.f32 %v1433, %v1436
        %v1439 = vadd.f32 %v1427, %v1437
        %v1440 = vadd.f32 %v1428, %v1438
        %s1441 = sld [smem:[#allocation6 + $0x27]]
        %s1442 = sld [smem:[#allocation6 + $0x58]]
        %1443 = vrot.lane.b32.xlu0 %v1349, 127
        %v1444 = vpop.permute.xlu0 %1443
        %1445 = vrot.lane.b32.xlu0 %v1350, 127
        %v1446 = vpop.permute.xlu0 %1445
        %v1447 = vsel %vm461, %v1444, %v1446
        %v1448 = vsel %vm461, %v1446, %v1444
        %v1449 = vstv %s1441
        %v1450 = vmul.f32 %v1449, %v1447
        %v1451 = vmul.f32 %v1449, %v1448
        %1452 = vrot.lane.b32.xlu0 %v1351, 127
        %v1453 = vpop.permute.xlu0 %1452
        %1454 = vrot.lane.b32.xlu0 %v1352, 127
        %v1455 = vpop.permute.xlu0 %1454
        %v1456 = vsel %vm461, %v1453, %v1455
        %v1457 = vsel %vm461, %v1455, %v1453
        %v1458 = vstv %s1442
        %v1459 = vmul.f32 %v1458, %v1456
        %v1460 = vmul.f32 %v1458, %v1457
        %v1461 = vadd.f32 %v1450, %v1459
        %v1462 = vadd.f32 %v1451, %v1460
        %v1463 = vmul.f32 %v1461, %v482
        %v1464 = vmul.f32 %v1462, %v486
        %v1465 = vadd.f32 %v1439, %v1463
        %v1466 = vadd.f32 %v1440, %v1464
        %s1467 = sld [smem:[#allocation6 + $0x28]]
        %s1468 = sld [smem:[#allocation6 + $0x59]]
        %1469 = vrot.lane.b32.xlu0 %v1349, 126
        %v1470 = vpop.permute.xlu0 %1469
        %1471 = vrot.lane.b32.xlu0 %v1350, 126
        %v1472 = vpop.permute.xlu0 %1471
        %v1473 = vsel %vm499, %v1470, %v1472
        %v1474 = vsel %vm499, %v1472, %v1470
        %v1475 = vstv %s1467
        %v1476 = vmul.f32 %v1475, %v1473
        %v1477 = vmul.f32 %v1475, %v1474
        %1478 = vrot.lane.b32.xlu0 %v1351, 126
        %v1479 = vpop.permute.xlu0 %1478
        %1480 = vrot.lane.b32.xlu0 %v1352, 126
        %v1481 = vpop.permute.xlu0 %1480
        %v1482 = vsel %vm499, %v1479, %v1481
        %v1483 = vsel %vm499, %v1481, %v1479
        %v1484 = vstv %s1468
        %v1485 = vmul.f32 %v1484, %v1482
        %v1486 = vmul.f32 %v1484, %v1483
        %v1487 = vadd.f32 %v1476, %v1485
        %v1488 = vadd.f32 %v1477, %v1486
        %v1489 = vmul.f32 %v1487, %v520
        %v1490 = vmul.f32 %v1488, %v524
        %v1491 = vadd.f32 %v1465, %v1489
        %v1492 = vadd.f32 %v1466, %v1490
        %s1493 = sld [smem:[#allocation6 + $0x29]]
        %s1494 = sld [smem:[#allocation6 + $0x5a]]
        %1495 = vrot.lane.b32.xlu0 %v1349, 125
        %v1496 = vpop.permute.xlu0 %1495
        %1497 = vrot.lane.b32.xlu0 %v1350, 125
        %v1498 = vpop.permute.xlu0 %1497
        %v1499 = vsel %vm537, %v1496, %v1498
        %v1500 = vsel %vm537, %v1498, %v1496
        %v1501 = vstv %s1493
        %v1502 = vmul.f32 %v1501, %v1499
        %v1503 = vmul.f32 %v1501, %v1500
        %1504 = vrot.lane.b32.xlu0 %v1351, 125
        %v1505 = vpop.permute.xlu0 %1504
        %1506 = vrot.lane.b32.xlu0 %v1352, 125
        %v1507 = vpop.permute.xlu0 %1506
        %v1508 = vsel %vm537, %v1505, %v1507
        %v1509 = vsel %vm537, %v1507, %v1505
        %v1510 = vstv %s1494
        %v1511 = vmul.f32 %v1510, %v1508
        %v1512 = vmul.f32 %v1510, %v1509
        %v1513 = vadd.f32 %v1502, %v1511
        %v1514 = vadd.f32 %v1503, %v1512
        %v1515 = vmul.f32 %v1513, %v558
        %v1516 = vmul.f32 %v1514, %v562
        %v1517 = vadd.f32 %v1491, %v1515
        %v1518 = vadd.f32 %v1492, %v1516
        %1519 = vrot.lane.b32.xlu0 %v273, 80
        %v1520 = vpop.permute.xlu0 %1519
        %1521 = vrot.lane.b32.xlu0 %v274, 80
        %v1522 = vpop.permute.xlu0 %1521
        %vm1523 = vcmp.lt.s32.totalorder %v305, 80
        %v1524 = vsel %vm1523, %v1520, %v1522
        %v1525 = vsel %vm1523, %v1522, %v1520
        %1526 = vrot.lane.b32.xlu0 %v281, 80
        %v1527 = vpop.permute.xlu0 %1526
        %1528 = vrot.lane.b32.xlu0 %v288, 80
        %v1529 = vpop.permute.xlu0 %1528
        %v1530 = vsel %vm1523, %v1527, %v1529
        %v1531 = vsel %vm1523, %v1529, %v1527
        %s1532 = scalar_lea.vmem [#allocation7], 6
        %v1533 = vld [vmem:[%s1532] ss:$8 sm:$0x3]
        %v1535 = vlaneseq
        %v1536 = vshrl.u32 %v1535, 7
        %v1537 = vsub.s32 0, %v1536
        %v1538 = vrot.slane %v1533, %v1537
        %v1539 = vlaneseq
        %v1540 = vshrl.u32 %v1539, 7
        %v1541 = vsub.s32 1, %v1540
        %v1542 = vrot.slane %v1533, %v1541
        %v1545 = vmul.f32 %v1524, %v1538
        %v1546 = vmul.f32 %v1525, %v1542
        %v1547 = vmul.f32 %v1530, %v1538
        %v1548 = vmul.f32 %v1531, %v1542
        %s1549 = sld [smem:[#allocation6 + $0x2a]]
        %s1550 = sld [smem:[#allocation6 + $0x5b]]
        %1551 = vrot.lane.b32.xlu0 %v1545, 3
        %v1552 = vpop.permute.xlu0 %1551
        %1553 = vrot.lane.b32.xlu0 %v1546, 3
        %v1554 = vpop.permute.xlu0 %1553
        %v1555 = vsel %vm337, %v1552, %v1554
        %v1556 = vsel %vm337, %v1554, %v1552
        %v1557 = vstv %s1549
        %v1558 = vmul.f32 %v1557, %v1556
        %v1559 = vmul.f32 %v1557, %v1555
        %1560 = vrot.lane.b32.xlu0 %v1547, 3
        %v1561 = vpop.permute.xlu0 %1560
        %1562 = vrot.lane.b32.xlu0 %v1548, 3
        %v1563 = vpop.permute.xlu0 %1562
        %v1564 = vsel %vm337, %v1561, %v1563
        %v1565 = vsel %vm337, %v1563, %v1561
        %v1566 = vstv %s1550
        %v1567 = vmul.f32 %v1566, %v1565
        %v1568 = vmul.f32 %v1566, %v1564
        %v1569 = vadd.f32 %v1558, %v1567
        %v1570 = vadd.f32 %v1559, %v1568
        %v1571 = vmul.f32 %v1569, %v358
        %v1572 = vmul.f32 %v1570, %v362
        %s1573 = sld [smem:[#allocation6 + $0x2b]]
        %s1574 = sld [smem:[#allocation6 + $0x5c]]
        %1575 = vrot.lane.b32.xlu0 %v1545, 2
        %v1576 = vpop.permute.xlu0 %1575
        %1577 = vrot.lane.b32.xlu0 %v1546, 2
        %v1578 = vpop.permute.xlu0 %1577
        %v1579 = vsel %vm373, %v1576, %v1578
        %v1580 = vsel %vm373, %v1578, %v1576
        %v1581 = vstv %s1573
        %v1582 = vmul.f32 %v1581, %v1580
        %v1583 = vmul.f32 %v1581, %v1579
        %1584 = vrot.lane.b32.xlu0 %v1547, 2
        %v1585 = vpop.permute.xlu0 %1584
        %1586 = vrot.lane.b32.xlu0 %v1548, 2
        %v1587 = vpop.permute.xlu0 %1586
        %v1588 = vsel %vm373, %v1585, %v1587
        %v1589 = vsel %vm373, %v1587, %v1585
        %v1590 = vstv %s1574
        %v1591 = vmul.f32 %v1590, %v1589
        %v1592 = vmul.f32 %v1590, %v1588
        %v1593 = vadd.f32 %v1582, %v1591
        %v1594 = vadd.f32 %v1583, %v1592
        %v1595 = vmul.f32 %v1593, %v394
        %v1596 = vmul.f32 %v1594, %v398
        %v1597 = vadd.f32 %v1571, %v1595
        %v1598 = vadd.f32 %v1572, %v1596
        %s1599 = sld [smem:[#allocation6 + $0x2c]]
        %s1600 = sld [smem:[#allocation6 + $0x5d]]
        %1601 = vrot.lane.b32.xlu0 %v1545, 1
        %v1602 = vpop.permute.xlu0 %1601
        %1603 = vrot.lane.b32.xlu0 %v1546, 1
        %v1604 = vpop.permute.xlu0 %1603
        %v1605 = vsel %vm411, %v1602, %v1604
        %v1606 = vsel %vm411, %v1604, %v1602
        %v1607 = vstv %s1599
        %v1608 = vmul.f32 %v1607, %v1606
        %v1609 = vmul.f32 %v1607, %v1605
        %1610 = vrot.lane.b32.xlu0 %v1547, 1
        %v1611 = vpop.permute.xlu0 %1610
        %1612 = vrot.lane.b32.xlu0 %v1548, 1
        %v1613 = vpop.permute.xlu0 %1612
        %v1614 = vsel %vm411, %v1611, %v1613
        %v1615 = vsel %vm411, %v1613, %v1611
        %v1616 = vstv %s1600
        %v1617 = vmul.f32 %v1616, %v1615
        %v1618 = vmul.f32 %v1616, %v1614
        %v1619 = vadd.f32 %v1608, %v1617
        %v1620 = vadd.f32 %v1609, %v1618
        %v1621 = vmul.f32 %v1619, %v432
        %v1622 = vmul.f32 %v1620, %v436
        %v1623 = vadd.f32 %v1597, %v1621
        %v1624 = vadd.f32 %v1598, %v1622
        %s1625 = sld [smem:[#allocation6 + $0x2d]]
        %s1626 = sld [smem:[#allocation6 + $0x5e]]
        %v1627 = vstv %s1625
        %v1628 = vmul.f32 %v1627, %v1545
        %v1629 = vmul.f32 %v1627, %v1546
        %v1630 = vstv %s1626
        %v1631 = vmul.f32 %v1630, %v1547
        %v1632 = vmul.f32 %v1630, %v1548
        %v1633 = vadd.f32 %v1628, %v1631
        %v1634 = vadd.f32 %v1629, %v1632
        %v1635 = vadd.f32 %v1623, %v1633
        %v1636 = vadd.f32 %v1624, %v1634
        %s1637 = sld [smem:[#allocation6 + $0x2e]]
        %s1638 = sld [smem:[#allocation6 + $0x5f]]
        %1639 = vrot.lane.b32.xlu0 %v1545, 127
        %v1640 = vpop.permute.xlu0 %1639
        %1641 = vrot.lane.b32.xlu0 %v1546, 127
        %v1642 = vpop.permute.xlu0 %1641
        %v1643 = vsel %vm461, %v1640, %v1642
        %v1644 = vsel %vm461, %v1642, %v1640
        %v1645 = vstv %s1637
        %v1646 = vmul.f32 %v1645, %v1643
        %v1647 = vmul.f32 %v1645, %v1644
        %1648 = vrot.lane.b32.xlu0 %v1547, 127
        %v1649 = vpop.permute.xlu0 %1648
        %1650 = vrot.lane.b32.xlu0 %v1548, 127
        %v1651 = vpop.permute.xlu0 %1650
        %v1652 = vsel %vm461, %v1649, %v1651
        %v1653 = vsel %vm461, %v1651, %v1649
        %v1654 = vstv %s1638
        %v1655 = vmul.f32 %v1654, %v1652
        %v1656 = vmul.f32 %v1654, %v1653
        %v1657 = vadd.f32 %v1646, %v1655
        %v1658 = vadd.f32 %v1647, %v1656
        %v1659 = vmul.f32 %v1657, %v482
        %v1660 = vmul.f32 %v1658, %v486
        %v1661 = vadd.f32 %v1635, %v1659
        %v1662 = vadd.f32 %v1636, %v1660
        %s1663 = sld [smem:[#allocation6 + $0x2f]]
        %s1664 = sld [smem:[#allocation6 + $0x60]]
        %1665 = vrot.lane.b32.xlu0 %v1545, 126
        %v1666 = vpop.permute.xlu0 %1665
        %1667 = vrot.lane.b32.xlu0 %v1546, 126
        %v1668 = vpop.permute.xlu0 %1667
        %v1669 = vsel %vm499, %v1666, %v1668
        %v1670 = vsel %vm499, %v1668, %v1666
        %v1671 = vstv %s1663
        %v1672 = vmul.f32 %v1671, %v1669
        %v1673 = vmul.f32 %v1671, %v1670
        %1674 = vrot.lane.b32.xlu0 %v1547, 126
        %v1675 = vpop.permute.xlu0 %1674
        %1676 = vrot.lane.b32.xlu0 %v1548, 126
        %v1677 = vpop.permute.xlu0 %1676
        %v1678 = vsel %vm499, %v1675, %v1677
        %v1679 = vsel %vm499, %v1677, %v1675
        %v1680 = vstv %s1664
        %v1681 = vmul.f32 %v1680, %v1678
        %v1682 = vmul.f32 %v1680, %v1679
        %v1683 = vadd.f32 %v1672, %v1681
        %v1684 = vadd.f32 %v1673, %v1682
        %v1685 = vmul.f32 %v1683, %v520
        %v1686 = vmul.f32 %v1684, %v524
        %v1687 = vadd.f32 %v1661, %v1685
        %v1688 = vadd.f32 %v1662, %v1686
        %s1689 = sld [smem:[#allocation6 + $0x30]]
        %s1690 = sld [smem:[#allocation6 + $0x61]]
        %1691 = vrot.lane.b32.xlu0 %v1545, 125
        %v1692 = vpop.permute.xlu0 %1691
        %1693 = vrot.lane.b32.xlu0 %v1546, 125
        %v1694 = vpop.permute.xlu0 %1693
        %v1695 = vsel %vm537, %v1692, %v1694
        %v1696 = vsel %vm537, %v1694, %v1692
        %v1697 = vstv %s1689
        %v1698 = vmul.f32 %v1697, %v1695
        %v1699 = vmul.f32 %v1697, %v1696
        %1700 = vrot.lane.b32.xlu0 %v1547, 125
        %v1701 = vpop.permute.xlu0 %1700
        %1702 = vrot.lane.b32.xlu0 %v1548, 125
        %v1703 = vpop.permute.xlu0 %1702
        %v1704 = vsel %vm537, %v1701, %v1703
        %v1705 = vsel %vm537, %v1703, %v1701
        %v1706 = vstv %s1690
        %v1707 = vmul.f32 %v1706, %v1704
        %v1708 = vmul.f32 %v1706, %v1705
        %v1709 = vadd.f32 %v1698, %v1707
        %v1710 = vadd.f32 %v1699, %v1708
        %v1711 = vmul.f32 %v1709, %v558
        %v1712 = vmul.f32 %v1710, %v562
        %v1713 = vadd.f32 %v1687, %v1711
        %v1714 = vadd.f32 %v1688, %v1712
        %v1715 = vadd.f32 %v567, %v763
        %v1716 = vadd.f32 %v568, %v764
        %v1717 = vadd.f32 %v1715, %v959
        %v1718 = vadd.f32 %v1716, %v960
        %v1719 = vadd.f32 %v1717, %v1125
        %v1720 = vadd.f32 %v1718, %v1126
        %v1721 = vadd.f32 %v1719, %v1321
        %v1722 = vadd.f32 %v1720, %v1322
        %v1723 = vadd.f32 %v1721, %v1517
        %v1724 = vadd.f32 %v1722, %v1518
        %v1725 = vadd.f32 %v1723, %v1713
        %v1726 = vadd.f32 %v1724, %v1714
        %v1727 = vxor.u32 %v1725, 2147483648
        %v1728 = vxor.u32 %v1726, 2147483648
        %v1729 = vmul.f32 %v1727, 1.442695
        %v1730 = vpow.pop %v1729
        %v1731 = vmul.f32 %v1728, 1.442695
        %v1732 = vpow.pop %v1731
        %v1733 = vadd.f32 %v1730, 1.0
        %v1734 = vadd.f32 %v1732, 1.0
        %v1735 = vrcp.pop %v1733
        %v1736 = vmul.f32 1.0, %v1735
        %v1737 = vrcp.pop %v1734
        %v1738 = vmul.f32 1.0, %v1737
        %v1741 = vcombine.low %v1736, %v1738
        %v1743 = vunpack.c.l.s4 1966171168
        %v1744 = vunpack.c.0.s8 %v1743
        %v1745 = vlaneseq
        %v1746 = vshrl.u32 %v1745, 7
        %v1747 = vsub.s32 %v1744, %v1746
        %v1748 = vrot.slane %v1741, %v1747
        %v1750 = vunpack.c.l.s4 1966171168
        %v1751 = vunpack.c.0.s8 %v1750
        %v1752 = vlaneseq
        %v1753 = vshrl.u32 %v1752, 7
        %v1754 = vsub.s32 %v1751, %v1753
        %v1755 = vrot.slane %v1748, %v1754
        %v1757 = vlaneseq
        %vm1758 = vcmp.ge.s32.totalorder %v1757, 0
        %vm1759 = vcmp.lt.s32.totalorder %v1757, 256
        %vm1760 = vmand %vm1758, %vm1759
        %1761 = vst.msk [vmem:[%s252] sm:$0x3] %vm1760, %v1755
        %s1762 = sand.u32 %s120, 1
        %s1763 = scalar_lea.sflag [#allocation4], %s1762
        %s1764 = sand.u32 %s120, 1
        %s1765 = smul.addr %s1764, 2
        %s1766 = scalar_lea.vmem [#allocation10], %s1765
        // Predicated region
        $region53: #{tpu_custom_call.1} parent=35 // pred_check
          %p1767 = pneg %p130
        $region54: #{tpu_custom_call.1} parent=35 // pred_check_branch
          %1769 = sbr.rel (%p1767) target = $region56
        $region55: #{tpu_custom_call.1} parent=35 // pred_region
          %s1771 = ssub.s32 32, 32
          %1772 = vsyncadd %s1763, %s1771
          %s1773 = smul.addr %s23, 2
          %s1774 = smul.addr %s1773, 16
          %s1775 = scalar_lea.hbm %s4, %s1774
          %s1777 = sshll.u32 %s1766, 4
          %s1778 = int_to_ptr.vmem [resolvable:$true] %s1777
          %1780 = dma.vmem_to_hbm [thread:$0]  %s1778, 32, %s1775, %s1763
        $region56: #{tpu_custom_call.1} parent=35 // pred_fallthru
          _
      $region36: #{tpu_custom_call.1} parent=5 // pred_fallthru
        _
      %p1781 = scmp.le.s32.totalorder 2, %s18
      // Predicated region
      $region57: #{tpu_custom_call.1} parent=5 // pred_check
        %p1782 = pneg %p1781
      $region58: #{tpu_custom_call.1} parent=5 // pred_check_branch
        %1784 = sbr.rel (%p1782) target = $region60
      $region59: #{tpu_custom_call.1} parent=5 // pred_region
        %s1785 = ssub.s32 %s18, 2
        // Predicated region
        $region61: #{tpu_custom_call.1} parent=59 // pred_check
          %p1786 = pneg %p136
        $region62: #{tpu_custom_call.1} parent=59 // pred_check_branch
          %1788 = sbr.rel (%p1786) target = $region64
        $region63: #{tpu_custom_call.1} parent=59 // pred_region
          %s1789 = sand.u32 %s121, 1
          %s1790 = scalar_lea.sflag [#allocation4], %s1789
          %s1791 = sand.u32 %s121, 1
          %s1792 = smul.addr %s1791, 2
          %s1793 = scalar_lea.vmem [#allocation10], %s1792
          %1794 = dma.done %s1790, 32
        $region64: #{tpu_custom_call.1} parent=59 // pred_fallthru
          _
      $region60: #{tpu_custom_call.1} parent=5 // pred_fallthru
        _
    $region6: #{tpu_custom_call.1} parent=1 // loop_footer
      %s22 = sadd.s32 1, %s18
    $region7: #{tpu_custom_call.1} parent=1 // loop_footer_branch
      %17 = sbr.rel target = $region3
    $region8: #{tpu_custom_call.1} parent=1 // loop_exit
      _
    %1795 = vsyncpa [#allocation3], 1
    %s1796 = scalar_lea.sflag [#allocation3], 1
    %1797 = vsyncpa %s1796, 1
    %1798 = vsyncpa [#allocation8], 1
    %1799 = vsyncpa [#allocation4], 1
    %s1800 = scalar_lea.sflag [#allocation4], 1
    %1801 = vsyncpa %s1800, 1
    %1802 = vsyncpa [#allocation5], 1
    %s1803 = scalar_lea.sflag [#allocation5], 1
    %1804 = vsyncpa %s1803, 1

</llo_original>
